<compile_context>
chip_gen: v6e
topology: v6e:2x2x1
jax: 0.10.0
libtpu: 0.0.40
codegen_flags: <defaults>
</compile_context>

<pallas_src>
import functools

import jax
import jax.numpy as jnp
from jax import lax
from jax.experimental import pallas as pl
from jax.experimental.pallas import tpu as pltpu


def kaiming_init(key, base, num_in, num_out):
    """JAX port of the module's kaiming_init (normal=True branch)."""
    f = jnp.sum(base * base) * num_in / base.shape[1]
    return jnp.sqrt(1.0 / f) * jax.random.normal(
        key, (num_in, num_out, base.shape[0]), dtype=base.dtype
    )


def _round_up(x, m):
    return (x + m - 1) // m * m


def _conv_kernel(halo_ref, x_ref, w_ref, o_ref, work_ref, *pool_scratch, K, stride):
    # halo_ref: (1, 1, max(K-1,1), WP, C)  top K-1 rows of the padded image
    # x_ref:    (1, 1, TH, WP, C)          current (non-overlapping) row block
    # w_ref:    (1, K*K*C, CoutF)          im2col weight (block-diagonal over fused groups)
    # o_ref:    stride==1: (1, 1, TH*Wc, CoutF)    else: (1, 1, TH//stride, Wo, CoutF)
    # work_ref: (TH + K - 1, WP, C)        row block + carried halo rows
    th = x_ref.shape[2]
    wp = x_ref.shape[3]
    cin = x_ref.shape[4]
    cout = w_ref.shape[2]
    wc = wp - (K - 1)
    halo = K - 1
    h = pl.program_id(2)

    if halo > 0:
        # Re-seed the halo with the top rows of this image at the start of its row sweep.
        @pl.when(h == 0)
        def _():
            work_ref[0:halo] = halo_ref[0, 0]

        work_ref[halo:halo + th] = x_ref[0, 0]

        # im2col: gather the K*K shifted taps and fuse them along the channel (lane) axis.
        taps = []
        for kh in range(K):
            for kw in range(K):
                taps.append(work_ref[kh:kh + th, kw:kw + wc, :])
        patch = jnp.concatenate(taps, axis=-1)          # (th, wc, K*K*cin)
    else:
        # 1x1 conv: the block itself is the patch.
        patch = x_ref[0, 0, :, 0:wc, :]

    patch = patch.reshape(th * wc, K * K * cin)
    # Single MXU matmul, contraction = K*K*C_fused, f32 accumulation.
    acc = jnp.dot(patch, w_ref[0], preferred_element_type=jnp.float32)

    if stride == 1:
        o_ref[0, 0] = acc.astype(o_ref.dtype)
    else:
        # Fused MaxPool2d(stride, stride), floor mode.
        pool_ref = pool_scratch[0]
        ho_t = th // stride
        wo = o_ref.shape[3]
        ws = wo * stride
        # H pooling: free leading-dim split + elementwise (VPU) max.
        conv4 = acc.reshape(ho_t, stride, wc, cout)
        hp = conv4[:, 0]
        for dh in range(1, stride):
            hp = jnp.maximum(hp, conv4[:, dh])
        # W pooling: strided (sublane) reads from a small VMEM scratch + elementwise max.
        pool_ref[...] = hp[:, :ws, :]
        pooled = pool_ref[:, pl.ds(0, wo, stride=stride), :]
        for dw in range(1, stride):
            pooled = jnp.maximum(pooled, pool_ref[:, pl.ds(dw, wo, stride=stride), :])
        o_ref[0, 0] = pooled.astype(o_ref.dtype)

    if halo > 0:
        # Carry the last K-1 rows of this block as the next row-tile's top halo.
        work_ref[0:halo] = work_ref[th:th + halo]


def _pick_tile_h(hc, stride, wp, wc_pad, cgi, kkc, coutf, in_bytes,
                 budget_bytes=20 * 1024 * 1024):
    """Largest H tile whose working set fits a conservative VMEM budget."""
    lane = 128
    row_in = wp * max(cgi, lane) * in_bytes                 # input block row (x2 pipeline + work)
    row_patch = wc_pad * _round_up(kkc, lane) * in_bytes    # im2col patch row
    row_acc = wc_pad * max(coutf, lane) * 4                 # f32 accumulator row
    row_out = wc_pad * max(coutf, lane) * 4                 # output block row (x2 pipeline)
    per_row = 3 * row_in + row_patch + row_acc + 2 * row_out
    th = max(1, budget_bytes // per_row)
    th = max(stride, th // stride * stride)
    th = min(th, _round_up(hc, stride))
    return int(th)


@functools.partial(jax.jit, static_argnames=("groups", "stride", "operand_dtype", "tile_h"))
def conv_forward(x, base, param, groups=1, stride=1,
                 operand_dtype=jnp.bfloat16, tile_h=None):
    """Forward pass equivalent to conv.forward (x is NCHW float32, returns NCHW)."""
    _, dro, dri, K, _ = base.shape
    num_in_g, num_out = param.shape[0], param.shape[1]
    N, Cin, H, W = x.shape

    Cin_g = num_in_g * dri
    Cout = num_out * dro
    assert Cin == Cin_g * groups, "input channels inconsistent with groups"
    assert Cout % groups == 0, "output channels must be divisible by groups"
    Cout_g = Cout // groups

    pad = K // 2
    Hc = H + 2 * pad - (K - 1)          # conv output height (stride-1 conv)
    Wc = W + 2 * pad - (K - 1)
    assert H >= (K - 1) - pad, "image too small for this kernel size"
    Ho = Hc // stride
    Wo = Wc // stride

    # ---- fuse groups into lane-dense chunks (block-diagonal weight) ---------------
    cap = max(1, 128 // max(Cin_g, Cout_g, 1))
    G_inner = max(1, min(groups, cap))
    while groups % G_inner:
        G_inner -= 1
    G_outer = groups // G_inner
    CgI = G_inner * Cin_g                # fused input channels  (lane dim of x)
    CoutF = G_inner * Cout_g             # fused output channels (lane dim of out)

    # ---- assemble the conv weight (eval-mode einsum of the module) ----------------
    kern = jnp.einsum("ijk,kmnpq->jminpq", param, base).reshape(Cout, Cin_g, K, K)
    k6 = kern.reshape(G_outer, G_inner, Cout_g, Cin_g, K, K)
    w6 = k6.transpose(0, 4, 5, 1, 3, 2)                 # (Go, K, K, Gi, Cin_g, Cout_g)
    eye = jnp.eye(G_inner, dtype=w6.dtype)
    wbd = jnp.einsum("opqgic,gh->opqgihc", w6, eye)     # block-diag over fused groups
    wq = wbd.reshape(G_outer, K * K * CgI, CoutF).astype(operand_dtype)

    # ---- tile geometry -------------------------------------------------------------
    in_bytes = jnp.dtype(operand_dtype).itemsize
    sub = max(8, 32 // in_bytes)                        # sublane multiple for clean reshapes
    Wc_pad = _round_up(Wc, sub)
    WP = Wc_pad + K - 1
    kkc = K * K * CgI
    TH = tile_h if tile_h is not None else _pick_tile_h(
        Hc, stride, WP, Wc_pad, CgI, kkc, CoutF, in_bytes)
    TH = max(stride, TH // stride * stride)
    TH = min(TH, _round_up(Hc, stride))
    n_h = -(-Hc // TH)
    halo_rows = max(K - 1, 1)

    # ---- input relayout: NCHW -> (G_outer, N, rows, WP, CgI), split into the -------
    #      non-overlapping row blocks plus a tiny (K-1)-row top halo.
    x_nhwc = jnp.transpose(x, (0, 2, 3, 1))
    wl = pad
    wr = WP - W - wl
    top_skip = (K - 1) - pad
    rows = n_h * TH
    bottom = rows - (H - top_skip)
    xs = jnp.pad(x_nhwc[:, top_skip:, :, :],
                 ((0, 0), (0, bottom), (wl, wr), (0, 0)))
    if K > 1:
        top = jnp.pad(x_nhwc[:, :top_skip, :, :],
                      ((0, 0), (pad, 0), (wl, wr), (0, 0)))
    else:
        top = jnp.zeros((N, 1, WP, Cin), x.dtype)

    def to_chunks(a):  # (N, R, WP, Cin) -> (G_outer, N, R, WP, CgI)
        n_, r_, wp_, _ = a.shape
        a = a.reshape(n_, r_, wp_, G_outer, CgI)
        return jnp.transpose(a, (3, 0, 1, 2, 4)).astype(operand_dtype)

    xs_c = to_chunks(xs)
    top_c = to_chunks(top)

    # ---- pallas_call ---------------------------------------------------------------
    in_specs = [
        pl.BlockSpec((1, 1, halo_rows, WP, CgI), lambda g, n, h: (g, n, 0, 0, 0)),
        pl.BlockSpec((1, 1, TH, WP, CgI), lambda g, n, h: (g, n, h, 0, 0)),
        pl.BlockSpec((1, kkc, CoutF), lambda g, n, h: (g, 0, 0)),
    ]
    scratch = [pltpu.VMEM((TH + K - 1, WP, CgI), operand_dtype)]
    if stride == 1:
        out_shape = jax.ShapeDtypeStruct((G_outer, N * n_h, TH * Wc_pad, CoutF), x.dtype)
        out_spec = pl.BlockSpec((1, 1, TH * Wc_pad, CoutF),
                                lambda g, n, h: (g, n * n_h + h, 0, 0))
    else:
        Ho_t = TH // stride
        out_shape = jax.ShapeDtypeStruct((G_outer, N * n_h, Ho_t, Wo, CoutF), x.dtype)
        out_spec = pl.BlockSpec((1, 1, Ho_t, Wo, CoutF),
                                lambda g, n, h: (g, n * n_h + h, 0, 0, 0))
        scratch.append(pltpu.VMEM((Ho_t, Wo * stride, CoutF), jnp.float32))

    out = pl.pallas_call(
        functools.partial(_conv_kernel, K=K, stride=stride),
        out_shape=out_shape,
        grid_spec=pltpu.PrefetchScalarGridSpec(
            num_scalar_prefetch=0,
            grid=(G_outer, N, n_h),
            in_specs=in_specs,
            out_specs=out_spec,
            scratch_shapes=scratch,
        ),
        compiler_params=pltpu.CompilerParams(
            dimension_semantics=("parallel", "parallel", "arbitrary"),
            vmem_limit_bytes=64 * 1024 * 1024,
        ),
    )(top_c, xs_c, wq)

    # ---- back to NCHW ---------------------------------------------------------------
    if stride == 1:
        y = out.reshape(G_outer, N, n_h * TH, Wc_pad, CoutF)[:, :, :Hc, :Wc, :]
    else:
        Ho_t = TH // stride
        y = out.reshape(G_outer, N, n_h * Ho_t, Wo, CoutF)[:, :, :Ho, :, :]
    y = jnp.transpose(y, (1, 0, 4, 2, 3))                 # (N, Go, CoutF, Hy, Wy)
    return y.reshape(N, Cout, y.shape[3], y.shape[4])


def conv_reference(x, base, param, groups=1, stride=1):
    """Pure-JAX reference (lax conv + reduce_window) for correctness checking."""
    _, dro, dri, K, _ = base.shape
    num_in_g, num_out = param.shape[0], param.shape[1]
    kern = jnp.einsum("ijk,kmnpq->jminpq", param, base).reshape(
        num_out * dro, num_in_g * dri, K, K)
    pad = K // 2
    out = lax.conv_general_dilated(
        x, kern, window_strides=(1, 1), padding=[(pad, pad), (pad, pad)],
        dimension_numbers=("NCHW", "OIHW", "NCHW"), feature_group_count=groups)
    if stride > 1:
        out = lax.reduce_window(
            out, -jnp.inf, lax.max,
            window_dimensions=(1, 1, stride, stride),
            window_strides=(1, 1, stride, stride), padding="VALID")
    return out


if __name__ == "__main__":
    root = jax.random.PRNGKey(0)

    bases, dim_rep_out, dim_rep_in = 3, 2, 2
    num_in_arg, num_out = 4, 4
    N, H, W = 2, 16, 16
    Cin = num_in_arg * dim_rep_in

    configs = [
        # (groups, stride, K, tile_h, operand dtype, atol, rtol)
        (1, 1, 3, None, jnp.float32, 3e-4, 3e-4),   # exact f32 operands
        (2, 1, 3, 8,    jnp.bfloat16, 8e-2, 8e-2),  # fused groups + H-tiling (halo carry)
        (1, 2, 3, 8,    jnp.bfloat16, 8e-2, 8e-2),  # fused in-kernel max-pool
        (1, 1, 4, None, jnp.bfloat16, 8e-2, 8e-2),  # even kernel size
    ]

    for idx, (groups, stride, K, tile_h, op_dtype, atol, rtol) in enumerate(configs):
        k_base, k_param, k_x = jax.random.split(jax.random.fold_in(root, idx), 3)
        base = jax.random.normal(
            k_base, (bases, dim_rep_out, dim_rep_in, K, K), dtype=jnp.float32)
        param = kaiming_init(k_param, base, num_in_arg // groups, num_out)
        x = jax.random.normal(k_x, (N, Cin, H, W), dtype=jnp.float32)

        y = conv_forward(x, base, param, groups=groups, stride=stride,
                         operand_dtype=op_dtype, tile_h=tile_h)
        y = jax.block_until_ready(y)
        y_ref = conv_reference(x, base, param, groups=groups, stride=stride)

        assert y.shape == y_ref.shape, (idx, y.shape, y_ref.shape)
        max_err = float(jnp.max(jnp.abs(y - y_ref)))
        assert jnp.allclose(y, y_ref, atol=atol, rtol=rtol), (idx, max_err)

    print("KERNEL_OK")
</pallas_src>

<mosaic_0001>
module attributes {stable_mosaic.version = 11 : i64} {
  func.func @_conv_kernel(%arg0: i32, %arg1: i32, %arg2: i32, %arg3: memref<1x1x2x18x8xf32, #tpu.memory_space<vmem>>, %arg4: memref<1x1x16x18x8xf32, #tpu.memory_space<vmem>>, %arg5: memref<1x72x8xf32, #tpu.memory_space<vmem>>, %arg6: memref<1x1x256x8xf32, #tpu.memory_space<vmem>>, %arg7: memref<18x18x8xf32, #tpu.memory_space<vmem>>) attributes {dimension_semantics = [#tpu.dimension_semantics<parallel>, #tpu.dimension_semantics<parallel>, #tpu.dimension_semantics<arbitrary>], iteration_bounds = array<i64: 1, 2, 1>, scalar_prefetch = 0 : i64, scratch_operands = 1 : i64, tpu.core_type = #tpu.core_type<tc>, window_params = [{transform_indices = @transform_0, window_bounds = array<i64: 1, 1, 2, 18, 8>}, {transform_indices = @transform_1, window_bounds = array<i64: 1, 1, 16, 18, 8>}, {transform_indices = @transform_2, window_bounds = array<i64: 1, 72, 8>}, {transform_indices = @transform_3, window_bounds = array<i64: 1, 1, 256, 8>}]} {
    %c0_i32 = arith.constant 0 : i32
    %0 = arith.cmpi eq, %arg2, %c0_i32 : i32
    %1 = arith.extui %0 : i1 to i32
    %c0_i32_0 = arith.constant 0 : i32
    %2 = arith.cmpi ne, %1, %c0_i32_0 : i32
    scf.if %2 {
      %c0_45 = arith.constant 0 : index
      %c0_46 = arith.constant 0 : index
      %c0_47 = arith.constant 0 : index
      %c0_48 = arith.constant 0 : index
      %c0_49 = arith.constant 0 : index
      %25 = vector.load %arg3[%c0_45, %c0_46, %c0_47, %c0_48, %c0_49] : memref<1x1x2x18x8xf32, #tpu.memory_space<vmem>>, vector<1x1x2x18x8xf32>
      %26 = vector.shape_cast %25 : vector<1x1x2x18x8xf32> to vector<2x18x8xf32>
      %c0_50 = arith.constant 0 : index
      %c0_51 = arith.constant 0 : index
      %c0_52 = arith.constant 0 : index
      %27 = vector.load %arg7[%c0_50, %c0_51, %c0_52] : memref<18x18x8xf32, #tpu.memory_space<vmem>>, vector<2x18x8xf32>
      tpu.vector_store %arg7[%c0_50, %c0_51, %c0_52], %26 {strides = array<i32>} : memref<18x18x8xf32, #tpu.memory_space<vmem>>, vector<2x18x8xf32>,
    } else {
    }
    %c0 = arith.constant 0 : index
    %c0_1 = arith.constant 0 : index
    %c0_2 = arith.constant 0 : index
    %c0_3 = arith.constant 0 : index
    %c0_4 = arith.constant 0 : index
    %3 = vector.load %arg4[%c0, %c0_1, %c0_2, %c0_3, %c0_4] : memref<1x1x16x18x8xf32, #tpu.memory_space<vmem>>, vector<1x1x16x18x8xf32>
    %4 = vector.shape_cast %3 : vector<1x1x16x18x8xf32> to vector<16x18x8xf32>
    %c2 = arith.constant 2 : index
    %c0_5 = arith.constant 0 : index
    %c0_6 = arith.constant 0 : index
    %5 = vector.load %arg7[%c2, %c0_5, %c0_6] : memref<18x18x8xf32, #tpu.memory_space<vmem>>, vector<16x18x8xf32>
    tpu.vector_store %arg7[%c2, %c0_5, %c0_6], %4 {strides = array<i32>} : memref<18x18x8xf32, #tpu.memory_space<vmem>>, vector<16x18x8xf32>,
    %c0_7 = arith.constant 0 : index
    %c0_8 = arith.constant 0 : index
    %c0_9 = arith.constant 0 : index
    %6 = vector.load %arg7[%c0_7, %c0_8, %c0_9] : memref<18x18x8xf32, #tpu.memory_space<vmem>>, vector<16x16x8xf32>
    %c0_10 = arith.constant 0 : index
    %c1 = arith.constant 1 : index
    %c0_11 = arith.constant 0 : index
    %7 = vector.load %arg7[%c0_10, %c1, %c0_11] : memref<18x18x8xf32, #tpu.memory_space<vmem>>, vector<16x16x8xf32>
    %c0_12 = arith.constant 0 : index
    %c2_13 = arith.constant 2 : index
    %c0_14 = arith.constant 0 : index
    %8 = vector.load %arg7[%c0_12, %c2_13, %c0_14] : memref<18x18x8xf32, #tpu.memory_space<vmem>>, vector<16x16x8xf32>
    %c1_15 = arith.constant 1 : index
    %c0_16 = arith.constant 0 : index
    %c0_17 = arith.constant 0 : index
    %9 = vector.load %arg7[%c1_15, %c0_16, %c0_17] : memref<18x18x8xf32, #tpu.memory_space<vmem>>, vector<16x16x8xf32>
    %c1_18 = arith.constant 1 : index
    %c1_19 = arith.constant 1 : index
    %c0_20 = arith.constant 0 : index
    %10 = vector.load %arg7[%c1_18, %c1_19, %c0_20] : memref<18x18x8xf32, #tpu.memory_space<vmem>>, vector<16x16x8xf32>
    %c1_21 = arith.constant 1 : index
    %c2_22 = arith.constant 2 : index
    %c0_23 = arith.constant 0 : index
    %11 = vector.load %arg7[%c1_21, %c2_22, %c0_23] : memref<18x18x8xf32, #tpu.memory_space<vmem>>, vector<16x16x8xf32>
    %c2_24 = arith.constant 2 : index
    %c0_25 = arith.constant 0 : index
    %c0_26 = arith.constant 0 : index
    %12 = vector.load %arg7[%c2_24, %c0_25, %c0_26] : memref<18x18x8xf32, #tpu.memory_space<vmem>>, vector<16x16x8xf32>
    %c2_27 = arith.constant 2 : index
    %c1_28 = arith.constant 1 : index
    %c0_29 = arith.constant 0 : index
    %13 = vector.load %arg7[%c2_27, %c1_28, %c0_29] : memref<18x18x8xf32, #tpu.memory_space<vmem>>, vector<16x16x8xf32>
    %c2_30 = arith.constant 2 : index
    %c2_31 = arith.constant 2 : index
    %c0_32 = arith.constant 0 : index
    %14 = vector.load %arg7[%c2_30, %c2_31, %c0_32] : memref<18x18x8xf32, #tpu.memory_space<vmem>>, vector<16x16x8xf32>
    %15 = tpu.concatenate %6, %7, %8, %9, %10, %11, %12, %13, %14 in 2 : vector<16x16x8xf32>, vector<16x16x8xf32>, vector<16x16x8xf32>, vector<16x16x8xf32>, vector<16x16x8xf32>, vector<16x16x8xf32>, vector<16x16x8xf32>, vector<16x16x8xf32>, vector<16x16x8xf32> -> vector<16x16x72xf32>
    %16 = vector.shape_cast %15 : vector<16x16x72xf32> to vector<256x72xf32>
    %c0_33 = arith.constant 0 : index
    %c0_34 = arith.constant 0 : index
    %c0_35 = arith.constant 0 : index
    %17 = vector.load %arg5[%c0_33, %c0_34, %c0_35] : memref<1x72x8xf32, #tpu.memory_space<vmem>>, vector<1x72x8xf32>
    %18 = vector.shape_cast %17 : vector<1x72x8xf32> to vector<72x8xf32>
    %cst = arith.constant dense<0.000000e+00> : vector<256x8xf32>
    %19 = tpu.matmul %16, %18, %cst {dimension_numbers = #tpu.dot_dimension_numbers<[1], [0], [0], [1], [0, 0, 1, 1], [], []>} : vector<256x72xf32>, vector<72x8xf32>, vector<256x8xf32> -> vector<256x8xf32>
    %c0_36 = arith.constant 0 : index
    %c0_37 = arith.constant 0 : index
    %c0_38 = arith.constant 0 : index
    %c0_39 = arith.constant 0 : index
    %20 = vector.load %arg6[%c0_36, %c0_37, %c0_38, %c0_39] : memref<1x1x256x8xf32, #tpu.memory_space<vmem>>, vector<1x1x256x8xf32>
    %21 = vector.shape_cast %20 : vector<1x1x256x8xf32> to vector<256x8xf32>
    %22 = vector.shape_cast %19 : vector<256x8xf32> to vector<1x1x256x8xf32>
    tpu.vector_store %arg6[%c0_36, %c0_37, %c0_38, %c0_39], %22 {strides = array<i32>} : memref<1x1x256x8xf32, #tpu.memory_space<vmem>>, vector<1x1x256x8xf32>,
    %c16 = arith.constant 16 : index
    %c0_40 = arith.constant 0 : index
    %c0_41 = arith.constant 0 : index
    %23 = vector.load %arg7[%c16, %c0_40, %c0_41] : memref<18x18x8xf32, #tpu.memory_space<vmem>>, vector<2x18x8xf32>
    %c0_42 = arith.constant 0 : index
    %c0_43 = arith.constant 0 : index
    %c0_44 = arith.constant 0 : index
    %24 = vector.load %arg7[%c0_42, %c0_43, %c0_44] : memref<18x18x8xf32, #tpu.memory_space<vmem>>, vector<2x18x8xf32>
    tpu.vector_store %arg7[%c0_42, %c0_43, %c0_44], %23 {strides = array<i32>} : memref<18x18x8xf32, #tpu.memory_space<vmem>>, vector<2x18x8xf32>,
    return
  }
  func.func @transform_0(%arg0: i32, %arg1: i32, %arg2: i32) -> (i32, i32, i32, i32, i32) {
    %c0_i32 = arith.constant 0 : i32
    %c0_i32_0 = arith.constant 0 : i32
    %c0_i32_1 = arith.constant 0 : i32
    %c0_i32_2 = arith.constant 0 : i32
    return %arg0, %arg1, %c0_i32, %c0_i32_0, %c0_i32_1 : i32, i32, i32, i32, i32
  }
  func.func @transform_1(%arg0: i32, %arg1: i32, %arg2: i32) -> (i32, i32, i32, i32, i32) {
    %c0_i32 = arith.constant 0 : i32
    %c0_i32_0 = arith.constant 0 : i32
    %c0_i32_1 = arith.constant 0 : i32
    return %arg0, %arg1, %arg2, %c0_i32, %c0_i32_0 : i32, i32, i32, i32, i32
  }
  func.func @transform_2(%arg0: i32, %arg1: i32, %arg2: i32) -> (i32, i32, i32) {
    %c0_i32 = arith.constant 0 : i32
    %c0_i32_0 = arith.constant 0 : i32
    %c0_i32_1 = arith.constant 0 : i32
    return %arg0, %c0_i32, %c0_i32_0 : i32, i32, i32
  }
  func.func @transform_3(%arg0: i32, %arg1: i32, %arg2: i32) -> (i32, i32, i32, i32) {
    %c1_i32 = arith.constant 1 : i32
    %0 = arith.muli %arg1, %c1_i32 : i32
    %1 = arith.addi %0, %arg2 : i32
    %c0_i32 = arith.constant 0 : i32
    %c0_i32_0 = arith.constant 0 : i32
    %c0_i32_1 = arith.constant 0 : i32
    return %arg0, %1, %c0_i32, %c0_i32_0 : i32, i32, i32, i32
  }
}

</mosaic_0001>

<llo_original>
// kernel: conv_forward.1
$region0: #{conv_forward.1}
  #allocation0 [shape = 'u32[]', space=smem, size = 0x4, offset = 0x4, fixed_abs, tag = 'smem constant byte address 0x4 - core index']
  #allocation1 [shape = 'u32[144,128]{1,0:T(1,128)}', space=vmem, size = 0x12000, scoped, tag = 'internal scratch']
  #allocation2 [shape = 'f32[18,18,8]{2,1,0:T(8,128)}', space=vmem, size = 0x36000, scoped, tag = 'scratch operand']
  %s0 = inlined_call_operand.vmem [shape: f32[1,2,2,18,8], index: 0, kind: input, shape index: {}]
  %s1 = inlined_call_operand.vmem [shape: f32[1,2,16,18,8], index: 1, kind: input, shape index: {}]
  %s2 = inlined_call_operand.vmem [shape: f32[1,72,8], index: 2, kind: input, shape index: {}]
  %s3 = inlined_call_operand.vmem [shape: f32[1,2,256,8], index: 3, kind: output, shape index: {}]
  %s4 = sld [smem:[#allocation0]]
  $region49: #{conv_forward.1} parent=0
    _
  %s6 = ssub.s32 1, %s4
  %s7 = scalar_select 0, %s6, %s4
  loop: start=0, step=1, limit=4
  $region2: #{conv_forward.1} parent=0 // loop_pre_header
    _
  $region3: #{conv_forward.1} parent=0 // loop_header
    %s9 = sphi 0, %s13
    %p10 = scmp.ge.s32.totalorder %s9, 4
    %s16 = sphi 0, %s35
    %s17 = sphi 0, %s31
    %s18 = sphi 0, %s27
    %s19 = sphi 0, %s16
    %s20 = sphi 0, %s17
    %s21 = sphi 0, %s18
    %s22 = sphi 0, %s19
    %s23 = sphi 0, %s20
    %s24 = sphi 0, %s21
    %s40 = sphi 0, %s42
    %s43 = sphi 0, %s40
    %s44 = sphi 0, %s43
    %s60 = sphi 0, %s44
    %s70 = sphi 0, %s72
    %s73 = sphi 0, %s70
    %s74 = sphi 0, %s73
    %s90 = sphi 0, %s74
    %s96 = sphi 0, %s98
    %s99 = sphi 0, %s96
    %s100 = sphi 0, %s99
    %s116 = sphi 0, %s100
    %s126 = sphi 0, %s128
    %s129 = sphi 0, %s126
    %s130 = sphi 0, %s129
    %s146 = sphi 0, %s130
  $region4: #{conv_forward.1} parent=0 // loop_header_branch
    %12 = sbr.rel (%p10) target = $region8
  $region5: #{conv_forward.1} parent=0 // loop_body
    %s14 = ssub.s32 %s9, 1
    %s15 = ssub.s32 %s9, 2
    %s25 = sadd.s32 1, %s18
    %p26 = scmp.ge.s32.totalorder %s25, 1
    %s27 = scalar_select %p26, 0, %s25
    %s28 = sadd.s32 1, %s17
    %s29 = scalar_select %p26, %s28, %s17
    %p30 = scmp.ge.s32.totalorder %s29, 2
    %s31 = scalar_select %p30, 0, %s29
    %s32 = sadd.s32 1, %s16
    %s33 = scalar_select %p30, %s32, %s16
    %p34 = scmp.ge.s32.totalorder %s33, 1
    %s35 = scalar_select %p34, 0, %s33
    %s36 = ssub.s32 %s16, %s35
    %s37 = ssub.s32 %s17, %s31
    %s38 = sor.u32 %s36, %s37
    %p39 = scmp.eq.s32.totalorder %s38, 0
    %s41 = sadd.s32 %s40, 1
    %s42 = scalar_select %p39, %s40, %s41
    %p45 = pneg %p39
    %p46 = scmp.eq.s32.totalorder %s9, 1
    %p47 = por %p45, %p46
    %p48 = scmp.ne.s32.totalorder %s40, %s43
    %p49 = scmp.eq.s32.totalorder %s9, 0
    %p50 = por %p48, %p49
    %p51 = scmp.ne.s32.totalorder %s40, %s43
    %p52 = scmp.eq.s32.totalorder %s14, 1
    %p53 = por %p51, %p52
    %p54 = scmp.ne.s32.totalorder %s43, %s44
    %p55 = scmp.eq.s32.totalorder %s14, 0
    %p56 = por %p54, %p55
    %p57 = scmp.ne.s32.totalorder %s43, %s44
    %p58 = scmp.eq.s32.totalorder %s15, 1
    %p59 = por %p57, %p58
    %p61 = scmp.ne.s32.totalorder %s44, %s60
    %p62 = scmp.eq.s32.totalorder %s15, 0
    %p63 = por %p61, %p62
    %s64 = ssub.s32 %s16, %s35
    %s65 = ssub.s32 %s17, %s31
    %s66 = sor.u32 %s64, %s65
    %s67 = ssub.s32 %s18, %s27
    %s68 = sor.u32 %s66, %s67
    %p69 = scmp.eq.s32.totalorder %s68, 0
    %s71 = sadd.s32 %s70, 1
    %s72 = scalar_select %p69, %s70, %s71
    %p75 = pneg %p69
    %p76 = scmp.eq.s32.totalorder %s9, 1
    %p77 = por %p75, %p76
    %p78 = scmp.ne.s32.totalorder %s70, %s73
    %p79 = scmp.eq.s32.totalorder %s9, 0
    %p80 = por %p78, %p79
    %p81 = scmp.ne.s32.totalorder %s70, %s73
    %p82 = scmp.eq.s32.totalorder %s14, 1
    %p83 = por %p81, %p82
    %p84 = scmp.ne.s32.totalorder %s73, %s74
    %p85 = scmp.eq.s32.totalorder %s14, 0
    %p86 = por %p84, %p85
    %p87 = scmp.ne.s32.totalorder %s73, %s74
    %p88 = scmp.eq.s32.totalorder %s15, 1
    %p89 = por %p87, %p88
    %p91 = scmp.ne.s32.totalorder %s74, %s90
    %p92 = scmp.eq.s32.totalorder %s15, 0
    %p93 = por %p91, %p92
    %s94 = ssub.s32 %s16, %s35
    %p95 = scmp.eq.s32.totalorder %s94, 0
    %s97 = sadd.s32 %s96, 1
    %s98 = scalar_select %p95, %s96, %s97
    %p101 = pneg %p95
    %p102 = scmp.eq.s32.totalorder %s9, 1
    %p103 = por %p101, %p102
    %p104 = scmp.ne.s32.totalorder %s96, %s99
    %p105 = scmp.eq.s32.totalorder %s9, 0
    %p106 = por %p104, %p105
    %p107 = scmp.ne.s32.totalorder %s96, %s99
    %p108 = scmp.eq.s32.totalorder %s14, 1
    %p109 = por %p107, %p108
    %p110 = scmp.ne.s32.totalorder %s99, %s100
    %p111 = scmp.eq.s32.totalorder %s14, 0
    %p112 = por %p110, %p111
    %p113 = scmp.ne.s32.totalorder %s99, %s100
    %p114 = scmp.eq.s32.totalorder %s15, 1
    %p115 = por %p113, %p114
    %p117 = scmp.ne.s32.totalorder %s100, %s116
    %p118 = scmp.eq.s32.totalorder %s15, 0
    %p119 = por %p117, %p118
    %s120 = sadd.s32 %s17, %s18
    %s121 = sadd.s32 %s31, %s27
    %s122 = ssub.s32 %s16, %s35
    %s123 = ssub.s32 %s120, %s121
    %s124 = sor.u32 %s122, %s123
    %p125 = scmp.eq.s32.totalorder %s124, 0
    %s127 = sadd.s32 %s126, 1
    %s128 = scalar_select %p125, %s126, %s127
    %p131 = pneg %p125
    %p132 = scmp.eq.s32.totalorder %s9, 1
    %p133 = por %p131, %p132
    %p134 = scmp.ne.s32.totalorder %s126, %s129
    %p135 = scmp.eq.s32.totalorder %s9, 0
    %p136 = por %p134, %p135
    %p137 = scmp.ne.s32.totalorder %s126, %s129
    %p138 = scmp.eq.s32.totalorder %s14, 1
    %p139 = por %p137, %p138
    %p140 = scmp.ne.s32.totalorder %s129, %s130
    %p141 = scmp.eq.s32.totalorder %s14, 0
    %p142 = por %p140, %p141
    %p143 = scmp.ne.s32.totalorder %s129, %s130
    %p144 = scmp.eq.s32.totalorder %s15, 1
    %p145 = por %p143, %p144
    %p147 = scmp.ne.s32.totalorder %s130, %s146
    %p148 = scmp.eq.s32.totalorder %s15, 0
    %p149 = por %p147, %p148
    %p150 = scmp.le.s32.totalorder 1, %s9
    %p151 = scmp.lt.s32.totalorder %s9, 3
    %p152 = pnand %p150, %p151
    %p153 = pneg %p152
    // Predicated region
    $region9: #{conv_forward.1} parent=5 // pred_check
      _
    $region10: #{conv_forward.1} parent=5 // pred_check_branch
      %155 = sbr.rel (%p152) target = $region12
    $region11: #{conv_forward.1} parent=5 // pred_region
      %s156 = ssub.s32 %s9, 1
      // Predicated region
      $region13: #{conv_forward.1} parent=11 // pred_check
        %p157 = pneg %p112
      $region14: #{conv_forward.1} parent=11 // pred_check_branch
        %159 = sbr.rel (%p157) target = $region16
      $region15: #{conv_forward.1} parent=11 // pred_region
        %p160 = scmp.lt.s32.totalorder %s19, 0
        %s161 = scalar_select %p160, %s19, 0
        %s162 = smul.addr %s161, 9
        %s163 = smul.addr %s162, 8
        %s164 = scalar_lea.vmem %s2, %s163
      $region16: #{conv_forward.1} parent=11 // pred_fallthru
        _
    $region12: #{conv_forward.1} parent=5 // pred_fallthru
      _
    %p165 = scmp.lt.s32.totalorder %s9, 2
    // Predicated region
    $region17: #{conv_forward.1} parent=5 // pred_check
      %p166 = pneg %p165
    $region18: #{conv_forward.1} parent=5 // pred_check_branch
      %168 = sbr.rel (%p166) target = $region20
    $region19: #{conv_forward.1} parent=5 // pred_region
      // Predicated region
      $region21: #{conv_forward.1} parent=19 // pred_check
        %p169 = pneg %p50
      $region22: #{conv_forward.1} parent=19 // pred_check_branch
        %171 = sbr.rel (%p169) target = $region24
      $region23: #{conv_forward.1} parent=19 // pred_region
        %p172 = scmp.lt.s32.totalorder %s16, 0
        %s173 = scalar_select %p172, %s16, 0
        %p174 = scmp.lt.s32.totalorder %s17, 1
        %s175 = scalar_select %p174, %s17, 1
        %s176 = smul.addr %s175, 6
        %s177 = smul.addr %s173, 12
        %s178 = sadd.s32 %s176, %s177
        %s179 = smul.addr %s178, 8
        %s180 = scalar_lea.vmem %s0, %s179
      $region24: #{conv_forward.1} parent=19 // pred_fallthru
        _
      // Predicated region
      $region25: #{conv_forward.1} parent=19 // pred_check
        %p181 = pneg %p80
      $region26: #{conv_forward.1} parent=19 // pred_check_branch
        %183 = sbr.rel (%p181) target = $region28
      $region27: #{conv_forward.1} parent=19 // pred_region
        %s184 = smul.u32 16, %s18
        %p185 = scmp.lt.s32.totalorder %s16, 0
        %s186 = scalar_select %p185, %s16, 0
        %p187 = scmp.lt.s32.totalorder %s17, 1
        %s188 = scalar_select %p187, %s17, 1
        %p189 = scmp.lt.s32.totalorder %s184, 15
        %s190 = scalar_select %p189, %s184, 15
        %s191 = smul.addr %s190, 3
        %s192 = smul.addr %s188, 48
        %s193 = sadd.s32 %s191, %s192
        %s194 = smul.addr %s186, 96
        %s195 = sadd.s32 %s193, %s194
        %s196 = smul.addr %s195, 8
        %s197 = scalar_lea.vmem %s1, %s196
        %s198 = smul.u32 16, %s18
      $region28: #{conv_forward.1} parent=19 // pred_fallthru
        _
    $region20: #{conv_forward.1} parent=5 // pred_fallthru
      _
    %p199 = scmp.le.s32.totalorder 1, %s9
    %p200 = scmp.lt.s32.totalorder %s9, 3
    %p201 = pnand %p199, %p200
    %p202 = pneg %p201
    // Predicated region
    $region29: #{conv_forward.1} parent=5 // pred_check
      _
    $region30: #{conv_forward.1} parent=5 // pred_check_branch
      %204 = sbr.rel (%p201) target = $region32
    $region31: #{conv_forward.1} parent=5 // pred_region
      %s205 = ssub.s32 %s9, 1
      %p206 = scmp.lt.s32.totalorder %s19, 0
      %s207 = scalar_select %p206, %s19, 0
      %p208 = scmp.lt.s32.totalorder %s20, 1
      %s209 = scalar_select %p208, %s20, 1
      %s210 = smul.addr %s209, 6
      %s211 = smul.addr %s207, 12
      %s212 = sadd.s32 %s210, %s211
      %s213 = smul.addr %s212, 8
      %s214 = scalar_lea.vmem %s0, %s213
      %p215 = pneg %p56
      %p216 = pneg %p53
      %s217 = smul.u32 16, %s21
      %p218 = scmp.lt.s32.totalorder %s19, 0
      %s219 = scalar_select %p218, %s19, 0
      %p220 = scmp.lt.s32.totalorder %s20, 1
      %s221 = scalar_select %p220, %s20, 1
      %p222 = scmp.lt.s32.totalorder %s217, 15
      %s223 = scalar_select %p222, %s217, 15
      %s224 = smul.addr %s223, 3
      %s225 = smul.addr %s221, 48
      %s226 = sadd.s32 %s224, %s225
      %s227 = smul.addr %s219, 96
      %s228 = sadd.s32 %s226, %s227
      %s229 = smul.addr %s228, 8
      %s230 = scalar_lea.vmem %s1, %s229
      %p231 = pneg %p86
      %p232 = pneg %p83
      %p233 = scmp.lt.s32.totalorder %s19, 0
      %s234 = scalar_select %p233, %s19, 0
      %s235 = smul.addr %s234, 9
      %s236 = smul.addr %s235, 8
      %s237 = scalar_lea.vmem %s2, %s236
      %p238 = pneg %p112
      %p239 = pneg %p109
      %p240 = pneg %p142
      %p241 = pneg %p139
      %s242 = sadd.s32 %s20, %s21
      %p243 = scmp.lt.s32.totalorder %s19, 0
      %s244 = scalar_select %p243, %s19, 0
      %p245 = scmp.lt.s32.totalorder %s242, 1
      %s246 = scalar_select %p245, %s242, 1
      %s247 = smul.addr %s246, 32
      %s248 = smul.addr %s244, 64
      %s249 = sadd.s32 %s247, %s248
      %s250 = smul.addr %s249, 8
      %s251 = scalar_lea.vmem %s3, %s250
      %p252 = scmp.lt.s32.totalorder %s19, 0
      %s253 = scalar_select %p252, %s19, 0
      %p254 = scmp.lt.s32.totalorder %s20, 1
      %s255 = scalar_select %p254, %s20, 1
      %s256 = smul.addr %s255, 6
      %s257 = smul.addr %s253, 12
      %s258 = sadd.s32 %s256, %s257
      %s259 = smul.addr %s258, 8
      %s260 = scalar_lea.vmem %s0, %s259
      %s261 = smul.u32 16, %s21
      %p262 = scmp.lt.s32.totalorder %s19, 0
      %s263 = scalar_select %p262, %s19, 0
      %p264 = scmp.lt.s32.totalorder %s20, 1
      %s265 = scalar_select %p264, %s20, 1
      %p266 = scmp.lt.s32.totalorder %s261, 15
      %s267 = scalar_select %p266, %s261, 15
      %s268 = smul.addr %s267, 3
      %s269 = smul.addr %s265, 48
      %s270 = sadd.s32 %s268, %s269
      %s271 = smul.addr %s263, 96
      %s272 = sadd.s32 %s270, %s271
      %s273 = smul.addr %s272, 8
      %s274 = scalar_lea.vmem %s1, %s273
      %s275 = smul.u32 16, %s21
      %p276 = scmp.lt.s32.totalorder %s19, 0
      %s277 = scalar_select %p276, %s19, 0
      %s278 = smul.addr %s277, 9
      %s279 = smul.addr %s278, 8
      %s280 = scalar_lea.vmem %s2, %s279
      %s281 = sadd.s32 %s20, %s21
      %p282 = scmp.lt.s32.totalorder %s19, 0
      %s283 = scalar_select %p282, %s19, 0
      %p284 = scmp.lt.s32.totalorder %s281, 1
      %s285 = scalar_select %p284, %s281, 1
      %s286 = smul.addr %s285, 32
      %s287 = smul.addr %s283, 64
      %s288 = sadd.s32 %s286, %s287
      %s289 = smul.addr %s288, 8
      %s290 = scalar_lea.vmem %s3, %s289
      %s291 = sadd.s32 %s20, %s21
      %p292 = scmp.eq.s32.totalorder %s21, 0
      // Predicated region
      $region33: #{conv_forward.1} parent=31 // pred_check
        %p293 = pneg %p292
      $region34: #{conv_forward.1} parent=31 // pred_check_branch
        %295 = sbr.rel (%p293) target = $region36
      $region35: #{conv_forward.1} parent=31 // pred_region
        %v296 = vld [vmem:[%s260] sm:$0xff]
        %v297 = vld [vmem:[%s260 + $0x8] sm:$0xff]
        %v298 = vld [vmem:[%s260 + $0x10] sm:$0x3]
        %v299 = vld [vmem:[%s260 + $0x18] sm:$0xff]
        %v300 = vld [vmem:[%s260 + $0x20] sm:$0xff]
        %v301 = vld [vmem:[%s260 + $0x28] sm:$0x3]
        %vm302 = vcmask 64512
        %303 = vst.msk [vmem:[#allocation2] sm:$0xff] %vm302, %v296
        %304 = vst.msk [vmem:[#allocation2 + $0x8] sm:$0xff] %vm302, %v297
        %vm305 = vcmask 58368
        %306 = vst.msk [vmem:[#allocation2 + $0x10] sm:$0x3] %vm305, %v298
        %307 = vst.msk [vmem:[#allocation2 + $0x18] sm:$0xff] %vm302, %v299
        %308 = vst.msk [vmem:[#allocation2 + $0x20] sm:$0xff] %vm302, %v300
        %309 = vst.msk [vmem:[#allocation2 + $0x28] sm:$0x3] %vm305, %v301
      $region36: #{conv_forward.1} parent=31 // pred_fallthru
        _
      %v310 = vld [vmem:[%s274] sm:$0xff]
      %v311 = vld [vmem:[%s274 + $0x8] sm:$0xff]
      %v312 = vld [vmem:[%s274 + $0x10] sm:$0x3]
      %v313 = vld [vmem:[%s274 + $0x18] sm:$0xff]
      %v314 = vld [vmem:[%s274 + $0x20] sm:$0xff]
      %v315 = vld [vmem:[%s274 + $0x28] sm:$0x3]
      %v316 = vld [vmem:[%s274 + $0x30] sm:$0xff]
      %v317 = vld [vmem:[%s274 + $0x38] sm:$0xff]
      %v318 = vld [vmem:[%s274 + $0x40] sm:$0x3]
      %v319 = vld [vmem:[%s274 + $0x48] sm:$0xff]
      %v320 = vld [vmem:[%s274 + $0x50] sm:$0xff]
      %v321 = vld [vmem:[%s274 + $0x58] sm:$0x3]
      %v322 = vld [vmem:[%s274 + $0x60] sm:$0xff]
      %v323 = vld [vmem:[%s274 + $0x68] sm:$0xff]
      %v324 = vld [vmem:[%s274 + $0x70] sm:$0x3]
      %v325 = vld [vmem:[%s274 + $0x78] sm:$0xff]
      %v326 = vld [vmem:[%s274 + $0x80] sm:$0xff]
      %v327 = vld [vmem:[%s274 + $0x88] sm:$0x3]
      %v328 = vld [vmem:[%s274 + $0x90] sm:$0xff]
      %v329 = vld [vmem:[%s274 + $0x98] sm:$0xff]
      %v330 = vld [vmem:[%s274 + $0xa0] sm:$0x3]
      %v331 = vld [vmem:[%s274 + $0xa8] sm:$0xff]
      %v332 = vld [vmem:[%s274 + $0xb0] sm:$0xff]
      %v333 = vld [vmem:[%s274 + $0xb8] sm:$0x3]
      %v334 = vld [vmem:[%s274 + $0xc0] sm:$0xff]
      %v335 = vld [vmem:[%s274 + $0xc8] sm:$0xff]
      %v336 = vld [vmem:[%s274 + $0xd0] sm:$0x3]
      %v337 = vld [vmem:[%s274 + $0xd8] sm:$0xff]
      %v338 = vld [vmem:[%s274 + $0xe0] sm:$0xff]
      %v339 = vld [vmem:[%s274 + $0xe8] sm:$0x3]
      %v340 = vld [vmem:[%s274 + $0xf0] sm:$0xff]
      %v341 = vld [vmem:[%s274 + $0xf8] sm:$0xff]
      %v342 = vld [vmem:[%s274 + $0x100] sm:$0x3]
      %v343 = vld [vmem:[%s274 + $0x108] sm:$0xff]
      %v344 = vld [vmem:[%s274 + $0x110] sm:$0xff]
      %v345 = vld [vmem:[%s274 + $0x118] sm:$0x3]
      %v346 = vld [vmem:[%s274 + $0x120] sm:$0xff]
      %v347 = vld [vmem:[%s274 + $0x128] sm:$0xff]
      %v348 = vld [vmem:[%s274 + $0x130] sm:$0x3]
      %v349 = vld [vmem:[%s274 + $0x138] sm:$0xff]
      %v350 = vld [vmem:[%s274 + $0x140] sm:$0xff]
      %v351 = vld [vmem:[%s274 + $0x148] sm:$0x3]
      %v352 = vld [vmem:[%s274 + $0x150] sm:$0xff]
      %v353 = vld [vmem:[%s274 + $0x158] sm:$0xff]
      %v354 = vld [vmem:[%s274 + $0x160] sm:$0x3]
      %v355 = vld [vmem:[%s274 + $0x168] sm:$0xff]
      %v356 = vld [vmem:[%s274 + $0x170] sm:$0xff]
      %v357 = vld [vmem:[%s274 + $0x178] sm:$0x3]
      %s358 = scalar_lea.vmem [#allocation2], 48
      %vm359 = vcmask 64512
      %360 = vst.msk [vmem:[%s358] sm:$0xff] %vm359, %v310
      %361 = vst.msk [vmem:[%s358 + $0x8] sm:$0xff] %vm359, %v311
      %vm362 = vcmask 58368
      %363 = vst.msk [vmem:[%s358 + $0x10] sm:$0x3] %vm362, %v312
      %364 = vst.msk [vmem:[%s358 + $0x18] sm:$0xff] %vm359, %v313
      %365 = vst.msk [vmem:[%s358 + $0x20] sm:$0xff] %vm359, %v314
      %366 = vst.msk [vmem:[%s358 + $0x28] sm:$0x3] %vm362, %v315
      %367 = vst.msk [vmem:[%s358 + $0x30] sm:$0xff] %vm359, %v316
      %368 = vst.msk [vmem:[%s358 + $0x38] sm:$0xff] %vm359, %v317
      %369 = vst.msk [vmem:[%s358 + $0x40] sm:$0x3] %vm362, %v318
      %370 = vst.msk [vmem:[%s358 + $0x48] sm:$0xff] %vm359, %v319
      %371 = vst.msk [vmem:[%s358 + $0x50] sm:$0xff] %vm359, %v320
      %372 = vst.msk [vmem:[%s358 + $0x58] sm:$0x3] %vm362, %v321
      %373 = vst.msk [vmem:[%s358 + $0x60] sm:$0xff] %vm359, %v322
      %374 = vst.msk [vmem:[%s358 + $0x68] sm:$0xff] %vm359, %v323
      %375 = vst.msk [vmem:[%s358 + $0x70] sm:$0x3] %vm362, %v324
      %376 = vst.msk [vmem:[%s358 + $0x78] sm:$0xff] %vm359, %v325
      %377 = vst.msk [vmem:[%s358 + $0x80] sm:$0xff] %vm359, %v326
      %378 = vst.msk [vmem:[%s358 + $0x88] sm:$0x3] %vm362, %v327
      %379 = vst.msk [vmem:[%s358 + $0x90] sm:$0xff] %vm359, %v328
      %380 = vst.msk [vmem:[%s358 + $0x98] sm:$0xff] %vm359, %v329
      %381 = vst.msk [vmem:[%s358 + $0xa0] sm:$0x3] %vm362, %v330
      %382 = vst.msk [vmem:[%s358 + $0xa8] sm:$0xff] %vm359, %v331
      %383 = vst.msk [vmem:[%s358 + $0xb0] sm:$0xff] %vm359, %v332
      %384 = vst.msk [vmem:[%s358 + $0xb8] sm:$0x3] %vm362, %v333
      %385 = vst.msk [vmem:[%s358 + $0xc0] sm:$0xff] %vm359, %v334
      %386 = vst.msk [vmem:[%s358 + $0xc8] sm:$0xff] %vm359, %v335
      %387 = vst.msk [vmem:[%s358 + $0xd0] sm:$0x3] %vm362, %v336
      %388 = vst.msk [vmem:[%s358 + $0xd8] sm:$0xff] %vm359, %v337
      %389 = vst.msk [vmem:[%s358 + $0xe0] sm:$0xff] %vm359, %v338
      %390 = vst.msk [vmem:[%s358 + $0xe8] sm:$0x3] %vm362, %v339
      %391 = vst.msk [vmem:[%s358 + $0xf0] sm:$0xff] %vm359, %v340
      %392 = vst.msk [vmem:[%s358 + $0xf8] sm:$0xff] %vm359, %v341
      %393 = vst.msk [vmem:[%s358 + $0x100] sm:$0x3] %vm362, %v342
      %394 = vst.msk [vmem:[%s358 + $0x108] sm:$0xff] %vm359, %v343
      %395 = vst.msk [vmem:[%s358 + $0x110] sm:$0xff] %vm359, %v344
      %396 = vst.msk [vmem:[%s358 + $0x118] sm:$0x3] %vm362, %v345
      %397 = vst.msk [vmem:[%s358 + $0x120] sm:$0xff] %vm359, %v346
      %398 = vst.msk [vmem:[%s358 + $0x128] sm:$0xff] %vm359, %v347
      %399 = vst.msk [vmem:[%s358 + $0x130] sm:$0x3] %vm362, %v348
      %400 = vst.msk [vmem:[%s358 + $0x138] sm:$0xff] %vm359, %v349
      %401 = vst.msk [vmem:[%s358 + $0x140] sm:$0xff] %vm359, %v350
      %402 = vst.msk [vmem:[%s358 + $0x148] sm:$0x3] %vm362, %v351
      %403 = vst.msk [vmem:[%s358 + $0x150] sm:$0xff] %vm359, %v352
      %404 = vst.msk [vmem:[%s358 + $0x158] sm:$0xff] %vm359, %v353
      %405 = vst.msk [vmem:[%s358 + $0x160] sm:$0x3] %vm362, %v354
      %406 = vst.msk [vmem:[%s358 + $0x168] sm:$0xff] %vm359, %v355
      %407 = vst.msk [vmem:[%s358 + $0x170] sm:$0xff] %vm359, %v356
      %408 = vst.msk [vmem:[%s358 + $0x178] sm:$0x3] %vm362, %v357
      %v409 = vld [vmem:[#allocation2] sm:$0xff]
      %v410 = vld [vmem:[#allocation2 + $0x8] sm:$0xff]
      %v411 = vld [vmem:[#allocation2 + $0x18] sm:$0xff]
      %v412 = vld [vmem:[#allocation2 + $0x20] sm:$0xff]
      %v413 = vld [vmem:[#allocation2 + $0x30] sm:$0xff]
      %v414 = vld [vmem:[#allocation2 + $0x38] sm:$0xff]
      %v415 = vld [vmem:[#allocation2 + $0x48] sm:$0xff]
      %v416 = vld [vmem:[#allocation2 + $0x50] sm:$0xff]
      %v417 = vld [vmem:[#allocation2 + $0x60] sm:$0xff]
      %v418 = vld [vmem:[#allocation2 + $0x68] sm:$0xff]
      %v419 = vld [vmem:[#allocation2 + $0x78] sm:$0xff]
      %v420 = vld [vmem:[#allocation2 + $0x80] sm:$0xff]
      %v421 = vld [vmem:[#allocation2 + $0x90] sm:$0xff]
      %v422 = vld [vmem:[#allocation2 + $0x98] sm:$0xff]
      %v423 = vld [vmem:[#allocation2 + $0xa8] sm:$0xff]
      %v424 = vld [vmem:[#allocation2 + $0xb0] sm:$0xff]
      %v425 = vld [vmem:[#allocation2 + $0xc0] sm:$0xff]
      %v426 = vld [vmem:[#allocation2 + $0xc8] sm:$0xff]
      %v427 = vld [vmem:[#allocation2 + $0xd8] sm:$0xff]
      %v428 = vld [vmem:[#allocation2 + $0xe0] sm:$0xff]
      %v429 = vld [vmem:[#allocation2 + $0xf0] sm:$0xff]
      %v430 = vld [vmem:[#allocation2 + $0xf8] sm:$0xff]
      %v431 = vld [vmem:[#allocation2 + $0x108] sm:$0xff]
      %v432 = vld [vmem:[#allocation2 + $0x110] sm:$0xff]
      %v433 = vld [vmem:[#allocation2 + $0x120] sm:$0xff]
      %v434 = vld [vmem:[#allocation2 + $0x128] sm:$0xff]
      %v435 = vld [vmem:[#allocation2 + $0x138] sm:$0xff]
      %v436 = vld [vmem:[#allocation2 + $0x140] sm:$0xff]
      %v437 = vld [vmem:[#allocation2 + $0x150] sm:$0xff]
      %v438 = vld [vmem:[#allocation2 + $0x158] sm:$0xff]
      %v439 = vld [vmem:[#allocation2 + $0x168] sm:$0xff]
      %v440 = vld [vmem:[#allocation2 + $0x170] sm:$0xff]
      %v441 = vld [vmem:[#allocation2 + $0x1] sm:$0xff]
      %v442 = vld [vmem:[#allocation2 + $0x9] sm:$0xff]
      %v443 = vld [vmem:[#allocation2 + $0x19] sm:$0xff]
      %v444 = vld [vmem:[#allocation2 + $0x21] sm:$0xff]
      %v445 = vld [vmem:[#allocation2 + $0x31] sm:$0xff]
      %v446 = vld [vmem:[#allocation2 + $0x39] sm:$0xff]
      %v447 = vld [vmem:[#allocation2 + $0x49] sm:$0xff]
      %v448 = vld [vmem:[#allocation2 + $0x51] sm:$0xff]
      %v449 = vld [vmem:[#allocation2 + $0x61] sm:$0xff]
      %v450 = vld [vmem:[#allocation2 + $0x69] sm:$0xff]
      %v451 = vld [vmem:[#allocation2 + $0x79] sm:$0xff]
      %v452 = vld [vmem:[#allocation2 + $0x81] sm:$0xff]
      %v453 = vld [vmem:[#allocation2 + $0x91] sm:$0xff]
      %v454 = vld [vmem:[#allocation2 + $0x99] sm:$0xff]
      %v455 = vld [vmem:[#allocation2 + $0xa9] sm:$0xff]
      %v456 = vld [vmem:[#allocation2 + $0xb1] sm:$0xff]
      %v457 = vld [vmem:[#allocation2 + $0xc1] sm:$0xff]
      %v458 = vld [vmem:[#allocation2 + $0xc9] sm:$0xff]
      %v459 = vld [vmem:[#allocation2 + $0xd9] sm:$0xff]
      %v460 = vld [vmem:[#allocation2 + $0xe1] sm:$0xff]
      %v461 = vld [vmem:[#allocation2 + $0xf1] sm:$0xff]
      %v462 = vld [vmem:[#allocation2 + $0xf9] sm:$0xff]
      %v463 = vld [vmem:[#allocation2 + $0x109] sm:$0xff]
      %v464 = vld [vmem:[#allocation2 + $0x111] sm:$0xff]
      %v465 = vld [vmem:[#allocation2 + $0x121] sm:$0xff]
      %v466 = vld [vmem:[#allocation2 + $0x129] sm:$0xff]
      %v467 = vld [vmem:[#allocation2 + $0x139] sm:$0xff]
      %v468 = vld [vmem:[#allocation2 + $0x141] sm:$0xff]
      %v469 = vld [vmem:[#allocation2 + $0x151] sm:$0xff]
      %v470 = vld [vmem:[#allocation2 + $0x159] sm:$0xff]
      %v471 = vld [vmem:[#allocation2 + $0x169] sm:$0xff]
      %v472 = vld [vmem:[#allocation2 + $0x171] sm:$0xff]
      %v473 = vld [vmem:[#allocation2 + $0x2] sm:$0xff]
      %v474 = vld [vmem:[#allocation2 + $0xa] sm:$0xff]
      %v475 = vld [vmem:[#allocation2 + $0x1a] sm:$0xff]
      %v476 = vld [vmem:[#allocation2 + $0x22] sm:$0xff]
      %v477 = vld [vmem:[#allocation2 + $0x32] sm:$0xff]
      %v478 = vld [vmem:[#allocation2 + $0x3a] sm:$0xff]
      %v479 = vld [vmem:[#allocation2 + $0x4a] sm:$0xff]
      %v480 = vld [vmem:[#allocation2 + $0x52] sm:$0xff]
      %v481 = vld [vmem:[#allocation2 + $0x62] sm:$0xff]
      %v482 = vld [vmem:[#allocation2 + $0x6a] sm:$0xff]
      %v483 = vld [vmem:[#allocation2 + $0x7a] sm:$0xff]
      %v484 = vld [vmem:[#allocation2 + $0x82] sm:$0xff]
      %v485 = vld [vmem:[#allocation2 + $0x92] sm:$0xff]
      %v486 = vld [vmem:[#allocation2 + $0x9a] sm:$0xff]
      %v487 = vld [vmem:[#allocation2 + $0xaa] sm:$0xff]
      %v488 = vld [vmem:[#allocation2 + $0xb2] sm:$0xff]
      %v489 = vld [vmem:[#allocation2 + $0xc2] sm:$0xff]
      %v490 = vld [vmem:[#allocation2 + $0xca] sm:$0xff]
      %v491 = vld [vmem:[#allocation2 + $0xda] sm:$0xff]
      %v492 = vld [vmem:[#allocation2 + $0xe2] sm:$0xff]
      %v493 = vld [vmem:[#allocation2 + $0xf2] sm:$0xff]
      %v494 = vld [vmem:[#allocation2 + $0xfa] sm:$0xff]
      %v495 = vld [vmem:[#allocation2 + $0x10a] sm:$0xff]
      %v496 = vld [vmem:[#allocation2 + $0x112] sm:$0xff]
      %v497 = vld [vmem:[#allocation2 + $0x122] sm:$0xff]
      %v498 = vld [vmem:[#allocation2 + $0x12a] sm:$0xff]
      %v499 = vld [vmem:[#allocation2 + $0x13a] sm:$0xff]
      %v500 = vld [vmem:[#allocation2 + $0x142] sm:$0xff]
      %v501 = vld [vmem:[#allocation2 + $0x152] sm:$0xff]
      %v502 = vld [vmem:[#allocation2 + $0x15a] sm:$0xff]
      %v503 = vld [vmem:[#allocation2 + $0x16a] sm:$0xff]
      %v504 = vld [vmem:[#allocation2 + $0x172] sm:$0xff]
      %s505 = scalar_lea.vmem [#allocation2], 24
      %v506 = vld [vmem:[%s505] sm:$0xff]
      %v507 = vld [vmem:[%s505 + $0x8] sm:$0xff]
      %v508 = vld [vmem:[%s505 + $0x18] sm:$0xff]
      %v509 = vld [vmem:[%s505 + $0x20] sm:$0xff]
      %v510 = vld [vmem:[%s505 + $0x30] sm:$0xff]
      %v511 = vld [vmem:[%s505 + $0x38] sm:$0xff]
      %v512 = vld [vmem:[%s505 + $0x48] sm:$0xff]
      %v513 = vld [vmem:[%s505 + $0x50] sm:$0xff]
      %v514 = vld [vmem:[%s505 + $0x60] sm:$0xff]
      %v515 = vld [vmem:[%s505 + $0x68] sm:$0xff]
      %v516 = vld [vmem:[%s505 + $0x78] sm:$0xff]
      %v517 = vld [vmem:[%s505 + $0x80] sm:$0xff]
      %v518 = vld [vmem:[%s505 + $0x90] sm:$0xff]
      %v519 = vld [vmem:[%s505 + $0x98] sm:$0xff]
      %v520 = vld [vmem:[%s505 + $0xa8] sm:$0xff]
      %v521 = vld [vmem:[%s505 + $0xb0] sm:$0xff]
      %v522 = vld [vmem:[%s505 + $0xc0] sm:$0xff]
      %v523 = vld [vmem:[%s505 + $0xc8] sm:$0xff]
      %v524 = vld [vmem:[%s505 + $0xd8] sm:$0xff]
      %v525 = vld [vmem:[%s505 + $0xe0] sm:$0xff]
      %v526 = vld [vmem:[%s505 + $0xf0] sm:$0xff]
      %v527 = vld [vmem:[%s505 + $0xf8] sm:$0xff]
      %v528 = vld [vmem:[%s505 + $0x108] sm:$0xff]
      %v529 = vld [vmem:[%s505 + $0x110] sm:$0xff]
      %v530 = vld [vmem:[%s505 + $0x120] sm:$0xff]
      %v531 = vld [vmem:[%s505 + $0x128] sm:$0xff]
      %v532 = vld [vmem:[%s505 + $0x138] sm:$0xff]
      %v533 = vld [vmem:[%s505 + $0x140] sm:$0xff]
      %v534 = vld [vmem:[%s505 + $0x150] sm:$0xff]
      %v535 = vld [vmem:[%s505 + $0x158] sm:$0xff]
      %v536 = vld [vmem:[%s505 + $0x168] sm:$0xff]
      %v537 = vld [vmem:[%s505 + $0x170] sm:$0xff]
      %v538 = vld [vmem:[%s505 + $0x1] sm:$0xff]
      %v539 = vld [vmem:[%s505 + $0x9] sm:$0xff]
      %v540 = vld [vmem:[%s505 + $0x19] sm:$0xff]
      %v541 = vld [vmem:[%s505 + $0x21] sm:$0xff]
      %v542 = vld [vmem:[%s505 + $0x31] sm:$0xff]
      %v543 = vld [vmem:[%s505 + $0x39] sm:$0xff]
      %v544 = vld [vmem:[%s505 + $0x49] sm:$0xff]
      %v545 = vld [vmem:[%s505 + $0x51] sm:$0xff]
      %v546 = vld [vmem:[%s505 + $0x61] sm:$0xff]
      %v547 = vld [vmem:[%s505 + $0x69] sm:$0xff]
      %v548 = vld [vmem:[%s505 + $0x79] sm:$0xff]
      %v549 = vld [vmem:[%s505 + $0x81] sm:$0xff]
      %v550 = vld [vmem:[%s505 + $0x91] sm:$0xff]
      %v551 = vld [vmem:[%s505 + $0x99] sm:$0xff]
      %v552 = vld [vmem:[%s505 + $0xa9] sm:$0xff]
      %v553 = vld [vmem:[%s505 + $0xb1] sm:$0xff]
      %v554 = vld [vmem:[%s505 + $0xc1] sm:$0xff]
      %v555 = vld [vmem:[%s505 + $0xc9] sm:$0xff]
      %v556 = vld [vmem:[%s505 + $0xd9] sm:$0xff]
      %v557 = vld [vmem:[%s505 + $0xe1] sm:$0xff]
      %v558 = vld [vmem:[%s505 + $0xf1] sm:$0xff]
      %v559 = vld [vmem:[%s505 + $0xf9] sm:$0xff]
      %v560 = vld [vmem:[%s505 + $0x109] sm:$0xff]
      %v561 = vld [vmem:[%s505 + $0x111] sm:$0xff]
      %v562 = vld [vmem:[%s505 + $0x121] sm:$0xff]
      %v563 = vld [vmem:[%s505 + $0x129] sm:$0xff]
      %v564 = vld [vmem:[%s505 + $0x139] sm:$0xff]
      %v565 = vld [vmem:[%s505 + $0x141] sm:$0xff]
      %v566 = vld [vmem:[%s505 + $0x151] sm:$0xff]
      %v567 = vld [vmem:[%s505 + $0x159] sm:$0xff]
      %v568 = vld [vmem:[%s505 + $0x169] sm:$0xff]
      %v569 = vld [vmem:[%s505 + $0x171] sm:$0xff]
      %v570 = vld [vmem:[%s505 + $0x2] sm:$0xff]
      %v571 = vld [vmem:[%s505 + $0xa] sm:$0xff]
      %v572 = vld [vmem:[%s505 + $0x1a] sm:$0xff]
      %v573 = vld [vmem:[%s505 + $0x22] sm:$0xff]
      %v574 = vld [vmem:[%s505 + $0x32] sm:$0xff]
      %v575 = vld [vmem:[%s505 + $0x3a] sm:$0xff]
      %v576 = vld [vmem:[%s505 + $0x4a] sm:$0xff]
      %v577 = vld [vmem:[%s505 + $0x52] sm:$0xff]
      %v578 = vld [vmem:[%s505 + $0x62] sm:$0xff]
      %v579 = vld [vmem:[%s505 + $0x6a] sm:$0xff]
      %v580 = vld [vmem:[%s505 + $0x7a] sm:$0xff]
      %v581 = vld [vmem:[%s505 + $0x82] sm:$0xff]
      %v582 = vld [vmem:[%s505 + $0x92] sm:$0xff]
      %v583 = vld [vmem:[%s505 + $0x9a] sm:$0xff]
      %v584 = vld [vmem:[%s505 + $0xaa] sm:$0xff]
      %v585 = vld [vmem:[%s505 + $0xb2] sm:$0xff]
      %v586 = vld [vmem:[%s505 + $0xc2] sm:$0xff]
      %v587 = vld [vmem:[%s505 + $0xca] sm:$0xff]
      %v588 = vld [vmem:[%s505 + $0xda] sm:$0xff]
      %v589 = vld [vmem:[%s505 + $0xe2] sm:$0xff]
      %v590 = vld [vmem:[%s505 + $0xf2] sm:$0xff]
      %v591 = vld [vmem:[%s505 + $0xfa] sm:$0xff]
      %v592 = vld [vmem:[%s505 + $0x10a] sm:$0xff]
      %v593 = vld [vmem:[%s505 + $0x112] sm:$0xff]
      %v594 = vld [vmem:[%s505 + $0x122] sm:$0xff]
      %v595 = vld [vmem:[%s505 + $0x12a] sm:$0xff]
      %v596 = vld [vmem:[%s505 + $0x13a] sm:$0xff]
      %v597 = vld [vmem:[%s505 + $0x142] sm:$0xff]
      %v598 = vld [vmem:[%s505 + $0x152] sm:$0xff]
      %v599 = vld [vmem:[%s505 + $0x15a] sm:$0xff]
      %v600 = vld [vmem:[%s505 + $0x16a] sm:$0xff]
      %v601 = vld [vmem:[%s505 + $0x172] sm:$0xff]
      %v602 = vld [vmem:[%s358] sm:$0xff]
      %v603 = vld [vmem:[%s358 + $0x8] sm:$0xff]
      %v604 = vld [vmem:[%s358 + $0x18] sm:$0xff]
      %v605 = vld [vmem:[%s358 + $0x20] sm:$0xff]
      %v606 = vld [vmem:[%s358 + $0x30] sm:$0xff]
      %v607 = vld [vmem:[%s358 + $0x38] sm:$0xff]
      %v608 = vld [vmem:[%s358 + $0x48] sm:$0xff]
      %v609 = vld [vmem:[%s358 + $0x50] sm:$0xff]
      %v610 = vld [vmem:[%s358 + $0x60] sm:$0xff]
      %v611 = vld [vmem:[%s358 + $0x68] sm:$0xff]
      %v612 = vld [vmem:[%s358 + $0x78] sm:$0xff]
      %v613 = vld [vmem:[%s358 + $0x80] sm:$0xff]
      %v614 = vld [vmem:[%s358 + $0x90] sm:$0xff]
      %v615 = vld [vmem:[%s358 + $0x98] sm:$0xff]
      %v616 = vld [vmem:[%s358 + $0xa8] sm:$0xff]
      %v617 = vld [vmem:[%s358 + $0xb0] sm:$0xff]
      %v618 = vld [vmem:[%s358 + $0xc0] sm:$0xff]
      %v619 = vld [vmem:[%s358 + $0xc8] sm:$0xff]
      %v620 = vld [vmem:[%s358 + $0xd8] sm:$0xff]
      %v621 = vld [vmem:[%s358 + $0xe0] sm:$0xff]
      %v622 = vld [vmem:[%s358 + $0xf0] sm:$0xff]
      %v623 = vld [vmem:[%s358 + $0xf8] sm:$0xff]
      %v624 = vld [vmem:[%s358 + $0x108] sm:$0xff]
      %v625 = vld [vmem:[%s358 + $0x110] sm:$0xff]
      %v626 = vld [vmem:[%s358 + $0x120] sm:$0xff]
      %v627 = vld [vmem:[%s358 + $0x128] sm:$0xff]
      %v628 = vld [vmem:[%s358 + $0x138] sm:$0xff]
      %v629 = vld [vmem:[%s358 + $0x140] sm:$0xff]
      %v630 = vld [vmem:[%s358 + $0x150] sm:$0xff]
      %v631 = vld [vmem:[%s358 + $0x158] sm:$0xff]
      %v632 = vld [vmem:[%s358 + $0x168] sm:$0xff]
      %v633 = vld [vmem:[%s358 + $0x170] sm:$0xff]
      %v634 = vld [vmem:[%s358 + $0x1] sm:$0xff]
      %v635 = vld [vmem:[%s358 + $0x9] sm:$0xff]
      %v636 = vld [vmem:[%s358 + $0x19] sm:$0xff]
      %v637 = vld [vmem:[%s358 + $0x21] sm:$0xff]
      %v638 = vld [vmem:[%s358 + $0x31] sm:$0xff]
      %v639 = vld [vmem:[%s358 + $0x39] sm:$0xff]
      %v640 = vld [vmem:[%s358 + $0x49] sm:$0xff]
      %v641 = vld [vmem:[%s358 + $0x51] sm:$0xff]
      %v642 = vld [vmem:[%s358 + $0x61] sm:$0xff]
      %v643 = vld [vmem:[%s358 + $0x69] sm:$0xff]
      %v644 = vld [vmem:[%s358 + $0x79] sm:$0xff]
      %v645 = vld [vmem:[%s358 + $0x81] sm:$0xff]
      %v646 = vld [vmem:[%s358 + $0x91] sm:$0xff]
      %v647 = vld [vmem:[%s358 + $0x99] sm:$0xff]
      %v648 = vld [vmem:[%s358 + $0xa9] sm:$0xff]
      %v649 = vld [vmem:[%s358 + $0xb1] sm:$0xff]
      %v650 = vld [vmem:[%s358 + $0xc1] sm:$0xff]
      %v651 = vld [vmem:[%s358 + $0xc9] sm:$0xff]
      %v652 = vld [vmem:[%s358 + $0xd9] sm:$0xff]
      %v653 = vld [vmem:[%s358 + $0xe1] sm:$0xff]
      %v654 = vld [vmem:[%s358 + $0xf1] sm:$0xff]
      %v655 = vld [vmem:[%s358 + $0xf9] sm:$0xff]
      %v656 = vld [vmem:[%s358 + $0x109] sm:$0xff]
      %v657 = vld [vmem:[%s358 + $0x111] sm:$0xff]
      %v658 = vld [vmem:[%s358 + $0x121] sm:$0xff]
      %v659 = vld [vmem:[%s358 + $0x129] sm:$0xff]
      %v660 = vld [vmem:[%s358 + $0x139] sm:$0xff]
      %v661 = vld [vmem:[%s358 + $0x141] sm:$0xff]
      %v662 = vld [vmem:[%s358 + $0x151] sm:$0xff]
      %v663 = vld [vmem:[%s358 + $0x159] sm:$0xff]
      %v664 = vld [vmem:[%s358 + $0x169] sm:$0xff]
      %v665 = vld [vmem:[%s358 + $0x171] sm:$0xff]
      %v666 = vld [vmem:[%s358 + $0x2] sm:$0xff]
      %v667 = vld [vmem:[%s358 + $0xa] sm:$0xff]
      %v668 = vld [vmem:[%s358 + $0x1a] sm:$0xff]
      %v669 = vld [vmem:[%s358 + $0x22] sm:$0xff]
      %v670 = vld [vmem:[%s358 + $0x32] sm:$0xff]
      %v671 = vld [vmem:[%s358 + $0x3a] sm:$0xff]
      %v672 = vld [vmem:[%s358 + $0x4a] sm:$0xff]
      %v673 = vld [vmem:[%s358 + $0x52] sm:$0xff]
      %v674 = vld [vmem:[%s358 + $0x62] sm:$0xff]
      %v675 = vld [vmem:[%s358 + $0x6a] sm:$0xff]
      %v676 = vld [vmem:[%s358 + $0x7a] sm:$0xff]
      %v677 = vld [vmem:[%s358 + $0x82] sm:$0xff]
      %v678 = vld [vmem:[%s358 + $0x92] sm:$0xff]
      %v679 = vld [vmem:[%s358 + $0x9a] sm:$0xff]
      %v680 = vld [vmem:[%s358 + $0xaa] sm:$0xff]
      %v681 = vld [vmem:[%s358 + $0xb2] sm:$0xff]
      %v682 = vld [vmem:[%s358 + $0xc2] sm:$0xff]
      %v683 = vld [vmem:[%s358 + $0xca] sm:$0xff]
      %v684 = vld [vmem:[%s358 + $0xda] sm:$0xff]
      %v685 = vld [vmem:[%s358 + $0xe2] sm:$0xff]
      %v686 = vld [vmem:[%s358 + $0xf2] sm:$0xff]
      %v687 = vld [vmem:[%s358 + $0xfa] sm:$0xff]
      %v688 = vld [vmem:[%s358 + $0x10a] sm:$0xff]
      %v689 = vld [vmem:[%s358 + $0x112] sm:$0xff]
      %v690 = vld [vmem:[%s358 + $0x122] sm:$0xff]
      %v691 = vld [vmem:[%s358 + $0x12a] sm:$0xff]
      %v692 = vld [vmem:[%s358 + $0x13a] sm:$0xff]
      %v693 = vld [vmem:[%s358 + $0x142] sm:$0xff]
      %v694 = vld [vmem:[%s358 + $0x152] sm:$0xff]
      %v695 = vld [vmem:[%s358 + $0x15a] sm:$0xff]
      %v696 = vld [vmem:[%s358 + $0x16a] sm:$0xff]
      %v697 = vld [vmem:[%s358 + $0x172] sm:$0xff]
      %730 = vrot.lane.b32.xlu0 %v441, 8
      %v731 = vpop.permute.xlu0 %730
      %732 = vrot.lane.b32.xlu0 %v442, 8
      %v733 = vpop.permute.xlu0 %732
      %734 = vrot.lane.b32.xlu0 %v443, 8
      %v735 = vpop.permute.xlu0 %734
      %736 = vrot.lane.b32.xlu0 %v444, 8
      %v737 = vpop.permute.xlu0 %736
      %738 = vrot.lane.b32.xlu0 %v445, 8
      %v739 = vpop.permute.xlu0 %738
      %740 = vrot.lane.b32.xlu0 %v446, 8
      %v741 = vpop.permute.xlu0 %740
      %742 = vrot.lane.b32.xlu0 %v447, 8
      %v743 = vpop.permute.xlu0 %742
      %744 = vrot.lane.b32.xlu0 %v448, 8
      %v745 = vpop.permute.xlu0 %744
      %746 = vrot.lane.b32.xlu0 %v449, 8
      %v747 = vpop.permute.xlu0 %746
      %748 = vrot.lane.b32.xlu0 %v450, 8
      %v749 = vpop.permute.xlu0 %748
      %750 = vrot.lane.b32.xlu0 %v451, 8
      %v751 = vpop.permute.xlu0 %750
      %752 = vrot.lane.b32.xlu0 %v452, 8
      %v753 = vpop.permute.xlu0 %752
      %754 = vrot.lane.b32.xlu0 %v453, 8
      %v755 = vpop.permute.xlu0 %754
      %756 = vrot.lane.b32.xlu0 %v454, 8
      %v757 = vpop.permute.xlu0 %756
      %758 = vrot.lane.b32.xlu0 %v455, 8
      %v759 = vpop.permute.xlu0 %758
      %760 = vrot.lane.b32.xlu0 %v456, 8
      %v761 = vpop.permute.xlu0 %760
      %762 = vrot.lane.b32.xlu0 %v457, 8
      %v763 = vpop.permute.xlu0 %762
      %764 = vrot.lane.b32.xlu0 %v458, 8
      %v765 = vpop.permute.xlu0 %764
      %766 = vrot.lane.b32.xlu0 %v459, 8
      %v767 = vpop.permute.xlu0 %766
      %768 = vrot.lane.b32.xlu0 %v460, 8
      %v769 = vpop.permute.xlu0 %768
      %770 = vrot.lane.b32.xlu0 %v461, 8
      %v771 = vpop.permute.xlu0 %770
      %772 = vrot.lane.b32.xlu0 %v462, 8
      %v773 = vpop.permute.xlu0 %772
      %774 = vrot.lane.b32.xlu0 %v463, 8
      %v775 = vpop.permute.xlu0 %774
      %776 = vrot.lane.b32.xlu0 %v464, 8
      %v777 = vpop.permute.xlu0 %776
      %778 = vrot.lane.b32.xlu0 %v465, 8
      %v779 = vpop.permute.xlu0 %778
      %780 = vrot.lane.b32.xlu0 %v466, 8
      %v781 = vpop.permute.xlu0 %780
      %782 = vrot.lane.b32.xlu0 %v467, 8
      %v783 = vpop.permute.xlu0 %782
      %784 = vrot.lane.b32.xlu0 %v468, 8
      %v785 = vpop.permute.xlu0 %784
      %786 = vrot.lane.b32.xlu0 %v469, 8
      %v787 = vpop.permute.xlu0 %786
      %788 = vrot.lane.b32.xlu0 %v470, 8
      %v789 = vpop.permute.xlu0 %788
      %790 = vrot.lane.b32.xlu0 %v471, 8
      %v791 = vpop.permute.xlu0 %790
      %792 = vrot.lane.b32.xlu0 %v472, 8
      %v793 = vpop.permute.xlu0 %792
      %858 = vrot.lane.b32.xlu0 %v473, 16
      %v859 = vpop.permute.xlu0 %858
      %860 = vrot.lane.b32.xlu0 %v474, 16
      %v861 = vpop.permute.xlu0 %860
      %862 = vrot.lane.b32.xlu0 %v475, 16
      %v863 = vpop.permute.xlu0 %862
      %864 = vrot.lane.b32.xlu0 %v476, 16
      %v865 = vpop.permute.xlu0 %864
      %866 = vrot.lane.b32.xlu0 %v477, 16
      %v867 = vpop.permute.xlu0 %866
      %868 = vrot.lane.b32.xlu0 %v478, 16
      %v869 = vpop.permute.xlu0 %868
      %870 = vrot.lane.b32.xlu0 %v479, 16
      %v871 = vpop.permute.xlu0 %870
      %872 = vrot.lane.b32.xlu0 %v480, 16
      %v873 = vpop.permute.xlu0 %872
      %874 = vrot.lane.b32.xlu0 %v481, 16
      %v875 = vpop.permute.xlu0 %874
      %876 = vrot.lane.b32.xlu0 %v482, 16
      %v877 = vpop.permute.xlu0 %876
      %878 = vrot.lane.b32.xlu0 %v483, 16
      %v879 = vpop.permute.xlu0 %878
      %880 = vrot.lane.b32.xlu0 %v484, 16
      %v881 = vpop.permute.xlu0 %880
      %882 = vrot.lane.b32.xlu0 %v485, 16
      %v883 = vpop.permute.xlu0 %882
      %884 = vrot.lane.b32.xlu0 %v486, 16
      %v885 = vpop.permute.xlu0 %884
      %886 = vrot.lane.b32.xlu0 %v487, 16
      %v887 = vpop.permute.xlu0 %886
      %888 = vrot.lane.b32.xlu0 %v488, 16
      %v889 = vpop.permute.xlu0 %888
      %890 = vrot.lane.b32.xlu0 %v489, 16
      %v891 = vpop.permute.xlu0 %890
      %892 = vrot.lane.b32.xlu0 %v490, 16
      %v893 = vpop.permute.xlu0 %892
      %894 = vrot.lane.b32.xlu0 %v491, 16
      %v895 = vpop.permute.xlu0 %894
      %896 = vrot.lane.b32.xlu0 %v492, 16
      %v897 = vpop.permute.xlu0 %896
      %898 = vrot.lane.b32.xlu0 %v493, 16
      %v899 = vpop.permute.xlu0 %898
      %900 = vrot.lane.b32.xlu0 %v494, 16
      %v901 = vpop.permute.xlu0 %900
      %902 = vrot.lane.b32.xlu0 %v495, 16
      %v903 = vpop.permute.xlu0 %902
      %904 = vrot.lane.b32.xlu0 %v496, 16
      %v905 = vpop.permute.xlu0 %904
      %906 = vrot.lane.b32.xlu0 %v497, 16
      %v907 = vpop.permute.xlu0 %906
      %908 = vrot.lane.b32.xlu0 %v498, 16
      %v909 = vpop.permute.xlu0 %908
      %910 = vrot.lane.b32.xlu0 %v499, 16
      %v911 = vpop.permute.xlu0 %910
      %912 = vrot.lane.b32.xlu0 %v500, 16
      %v913 = vpop.permute.xlu0 %912
      %914 = vrot.lane.b32.xlu0 %v501, 16
      %v915 = vpop.permute.xlu0 %914
      %916 = vrot.lane.b32.xlu0 %v502, 16
      %v917 = vpop.permute.xlu0 %916
      %918 = vrot.lane.b32.xlu0 %v503, 16
      %v919 = vpop.permute.xlu0 %918
      %920 = vrot.lane.b32.xlu0 %v504, 16
      %v921 = vpop.permute.xlu0 %920
      %986 = vrot.lane.b32.xlu0 %v506, 24
      %v987 = vpop.permute.xlu0 %986
      %988 = vrot.lane.b32.xlu0 %v507, 24
      %v989 = vpop.permute.xlu0 %988
      %990 = vrot.lane.b32.xlu0 %v508, 24
      %v991 = vpop.permute.xlu0 %990
      %992 = vrot.lane.b32.xlu0 %v509, 24
      %v993 = vpop.permute.xlu0 %992
      %994 = vrot.lane.b32.xlu0 %v510, 24
      %v995 = vpop.permute.xlu0 %994
      %996 = vrot.lane.b32.xlu0 %v511, 24
      %v997 = vpop.permute.xlu0 %996
      %998 = vrot.lane.b32.xlu0 %v512, 24
      %v999 = vpop.permute.xlu0 %998
      %1000 = vrot.lane.b32.xlu0 %v513, 24
      %v1001 = vpop.permute.xlu0 %1000
      %1002 = vrot.lane.b32.xlu0 %v514, 24
      %v1003 = vpop.permute.xlu0 %1002
      %1004 = vrot.lane.b32.xlu0 %v515, 24
      %v1005 = vpop.permute.xlu0 %1004
      %1006 = vrot.lane.b32.xlu0 %v516, 24
      %v1007 = vpop.permute.xlu0 %1006
      %1008 = vrot.lane.b32.xlu0 %v517, 24
      %v1009 = vpop.permute.xlu0 %1008
      %1010 = vrot.lane.b32.xlu0 %v518, 24
      %v1011 = vpop.permute.xlu0 %1010
      %1012 = vrot.lane.b32.xlu0 %v519, 24
      %v1013 = vpop.permute.xlu0 %1012
      %1014 = vrot.lane.b32.xlu0 %v520, 24
      %v1015 = vpop.permute.xlu0 %1014
      %1016 = vrot.lane.b32.xlu0 %v521, 24
      %v1017 = vpop.permute.xlu0 %1016
      %1018 = vrot.lane.b32.xlu0 %v522, 24
      %v1019 = vpop.permute.xlu0 %1018
      %1020 = vrot.lane.b32.xlu0 %v523, 24
      %v1021 = vpop.permute.xlu0 %1020
      %1022 = vrot.lane.b32.xlu0 %v524, 24
      %v1023 = vpop.permute.xlu0 %1022
      %1024 = vrot.lane.b32.xlu0 %v525, 24
      %v1025 = vpop.permute.xlu0 %1024
      %1026 = vrot.lane.b32.xlu0 %v526, 24
      %v1027 = vpop.permute.xlu0 %1026
      %1028 = vrot.lane.b32.xlu0 %v527, 24
      %v1029 = vpop.permute.xlu0 %1028
      %1030 = vrot.lane.b32.xlu0 %v528, 24
      %v1031 = vpop.permute.xlu0 %1030
      %1032 = vrot.lane.b32.xlu0 %v529, 24
      %v1033 = vpop.permute.xlu0 %1032
      %1034 = vrot.lane.b32.xlu0 %v530, 24
      %v1035 = vpop.permute.xlu0 %1034
      %1036 = vrot.lane.b32.xlu0 %v531, 24
      %v1037 = vpop.permute.xlu0 %1036
      %1038 = vrot.lane.b32.xlu0 %v532, 24
      %v1039 = vpop.permute.xlu0 %1038
      %1040 = vrot.lane.b32.xlu0 %v533, 24
      %v1041 = vpop.permute.xlu0 %1040
      %1042 = vrot.lane.b32.xlu0 %v534, 24
      %v1043 = vpop.permute.xlu0 %1042
      %1044 = vrot.lane.b32.xlu0 %v535, 24
      %v1045 = vpop.permute.xlu0 %1044
      %1046 = vrot.lane.b32.xlu0 %v536, 24
      %v1047 = vpop.permute.xlu0 %1046
      %1048 = vrot.lane.b32.xlu0 %v537, 24
      %v1049 = vpop.permute.xlu0 %1048
      %1114 = vrot.lane.b32.xlu0 %v538, 32
      %v1115 = vpop.permute.xlu0 %1114
      %1116 = vrot.lane.b32.xlu0 %v539, 32
      %v1117 = vpop.permute.xlu0 %1116
      %1118 = vrot.lane.b32.xlu0 %v540, 32
      %v1119 = vpop.permute.xlu0 %1118
      %1120 = vrot.lane.b32.xlu0 %v541, 32
      %v1121 = vpop.permute.xlu0 %1120
      %1122 = vrot.lane.b32.xlu0 %v542, 32
      %v1123 = vpop.permute.xlu0 %1122
      %1124 = vrot.lane.b32.xlu0 %v543, 32
      %v1125 = vpop.permute.xlu0 %1124
      %1126 = vrot.lane.b32.xlu0 %v544, 32
      %v1127 = vpop.permute.xlu0 %1126
      %1128 = vrot.lane.b32.xlu0 %v545, 32
      %v1129 = vpop.permute.xlu0 %1128
      %1130 = vrot.lane.b32.xlu0 %v546, 32
      %v1131 = vpop.permute.xlu0 %1130
      %1132 = vrot.lane.b32.xlu0 %v547, 32
      %v1133 = vpop.permute.xlu0 %1132
      %1134 = vrot.lane.b32.xlu0 %v548, 32
      %v1135 = vpop.permute.xlu0 %1134
      %1136 = vrot.lane.b32.xlu0 %v549, 32
      %v1137 = vpop.permute.xlu0 %1136
      %1138 = vrot.lane.b32.xlu0 %v550, 32
      %v1139 = vpop.permute.xlu0 %1138
      %1140 = vrot.lane.b32.xlu0 %v551, 32
      %v1141 = vpop.permute.xlu0 %1140
      %1142 = vrot.lane.b32.xlu0 %v552, 32
      %v1143 = vpop.permute.xlu0 %1142
      %1144 = vrot.lane.b32.xlu0 %v553, 32
      %v1145 = vpop.permute.xlu0 %1144
      %1146 = vrot.lane.b32.xlu0 %v554, 32
      %v1147 = vpop.permute.xlu0 %1146
      %1148 = vrot.lane.b32.xlu0 %v555, 32
      %v1149 = vpop.permute.xlu0 %1148
      %1150 = vrot.lane.b32.xlu0 %v556, 32
      %v1151 = vpop.permute.xlu0 %1150
      %1152 = vrot.lane.b32.xlu0 %v557, 32
      %v1153 = vpop.permute.xlu0 %1152
      %1154 = vrot.lane.b32.xlu0 %v558, 32
      %v1155 = vpop.permute.xlu0 %1154
      %1156 = vrot.lane.b32.xlu0 %v559, 32
      %v1157 = vpop.permute.xlu0 %1156
      %1158 = vrot.lane.b32.xlu0 %v560, 32
      %v1159 = vpop.permute.xlu0 %1158
      %1160 = vrot.lane.b32.xlu0 %v561, 32
      %v1161 = vpop.permute.xlu0 %1160
      %1162 = vrot.lane.b32.xlu0 %v562, 32
      %v1163 = vpop.permute.xlu0 %1162
      %1164 = vrot.lane.b32.xlu0 %v563, 32
      %v1165 = vpop.permute.xlu0 %1164
      %1166 = vrot.lane.b32.xlu0 %v564, 32
      %v1167 = vpop.permute.xlu0 %1166
      %1168 = vrot.lane.b32.xlu0 %v565, 32
      %v1169 = vpop.permute.xlu0 %1168
      %1170 = vrot.lane.b32.xlu0 %v566, 32
      %v1171 = vpop.permute.xlu0 %1170
      %1172 = vrot.lane.b32.xlu0 %v567, 32
      %v1173 = vpop.permute.xlu0 %1172
      %1174 = vrot.lane.b32.xlu0 %v568, 32
      %v1175 = vpop.permute.xlu0 %1174
      %1176 = vrot.lane.b32.xlu0 %v569, 32
      %v1177 = vpop.permute.xlu0 %1176
      %1242 = vrot.lane.b32.xlu0 %v570, 40
      %v1243 = vpop.permute.xlu0 %1242
      %1244 = vrot.lane.b32.xlu0 %v571, 40
      %v1245 = vpop.permute.xlu0 %1244
      %1246 = vrot.lane.b32.xlu0 %v572, 40
      %v1247 = vpop.permute.xlu0 %1246
      %1248 = vrot.lane.b32.xlu0 %v573, 40
      %v1249 = vpop.permute.xlu0 %1248
      %1250 = vrot.lane.b32.xlu0 %v574, 40
      %v1251 = vpop.permute.xlu0 %1250
      %1252 = vrot.lane.b32.xlu0 %v575, 40
      %v1253 = vpop.permute.xlu0 %1252
      %1254 = vrot.lane.b32.xlu0 %v576, 40
      %v1255 = vpop.permute.xlu0 %1254
      %1256 = vrot.lane.b32.xlu0 %v577, 40
      %v1257 = vpop.permute.xlu0 %1256
      %1258 = vrot.lane.b32.xlu0 %v578, 40
      %v1259 = vpop.permute.xlu0 %1258
      %1260 = vrot.lane.b32.xlu0 %v579, 40
      %v1261 = vpop.permute.xlu0 %1260
      %1262 = vrot.lane.b32.xlu0 %v580, 40
      %v1263 = vpop.permute.xlu0 %1262
      %1264 = vrot.lane.b32.xlu0 %v581, 40
      %v1265 = vpop.permute.xlu0 %1264
      %1266 = vrot.lane.b32.xlu0 %v582, 40
      %v1267 = vpop.permute.xlu0 %1266
      %1268 = vrot.lane.b32.xlu0 %v583, 40
      %v1269 = vpop.permute.xlu0 %1268
      %1270 = vrot.lane.b32.xlu0 %v584, 40
      %v1271 = vpop.permute.xlu0 %1270
      %1272 = vrot.lane.b32.xlu0 %v585, 40
      %v1273 = vpop.permute.xlu0 %1272
      %1274 = vrot.lane.b32.xlu0 %v586, 40
      %v1275 = vpop.permute.xlu0 %1274
      %1276 = vrot.lane.b32.xlu0 %v587, 40
      %v1277 = vpop.permute.xlu0 %1276
      %1278 = vrot.lane.b32.xlu0 %v588, 40
      %v1279 = vpop.permute.xlu0 %1278
      %1280 = vrot.lane.b32.xlu0 %v589, 40
      %v1281 = vpop.permute.xlu0 %1280
      %1282 = vrot.lane.b32.xlu0 %v590, 40
      %v1283 = vpop.permute.xlu0 %1282
      %1284 = vrot.lane.b32.xlu0 %v591, 40
      %v1285 = vpop.permute.xlu0 %1284
      %1286 = vrot.lane.b32.xlu0 %v592, 40
      %v1287 = vpop.permute.xlu0 %1286
      %1288 = vrot.lane.b32.xlu0 %v593, 40
      %v1289 = vpop.permute.xlu0 %1288
      %1290 = vrot.lane.b32.xlu0 %v594, 40
      %v1291 = vpop.permute.xlu0 %1290
      %1292 = vrot.lane.b32.xlu0 %v595, 40
      %v1293 = vpop.permute.xlu0 %1292
      %1294 = vrot.lane.b32.xlu0 %v596, 40
      %v1295 = vpop.permute.xlu0 %1294
      %1296 = vrot.lane.b32.xlu0 %v597, 40
      %v1297 = vpop.permute.xlu0 %1296
      %1298 = vrot.lane.b32.xlu0 %v598, 40
      %v1299 = vpop.permute.xlu0 %1298
      %1300 = vrot.lane.b32.xlu0 %v599, 40
      %v1301 = vpop.permute.xlu0 %1300
      %1302 = vrot.lane.b32.xlu0 %v600, 40
      %v1303 = vpop.permute.xlu0 %1302
      %1304 = vrot.lane.b32.xlu0 %v601, 40
      %v1305 = vpop.permute.xlu0 %1304
      %1370 = vrot.lane.b32.xlu0 %v602, 48
      %v1371 = vpop.permute.xlu0 %1370
      %1372 = vrot.lane.b32.xlu0 %v603, 48
      %v1373 = vpop.permute.xlu0 %1372
      %1374 = vrot.lane.b32.xlu0 %v604, 48
      %v1375 = vpop.permute.xlu0 %1374
      %1376 = vrot.lane.b32.xlu0 %v605, 48
      %v1377 = vpop.permute.xlu0 %1376
      %1378 = vrot.lane.b32.xlu0 %v606, 48
      %v1379 = vpop.permute.xlu0 %1378
      %1380 = vrot.lane.b32.xlu0 %v607, 48
      %v1381 = vpop.permute.xlu0 %1380
      %1382 = vrot.lane.b32.xlu0 %v608, 48
      %v1383 = vpop.permute.xlu0 %1382
      %1384 = vrot.lane.b32.xlu0 %v609, 48
      %v1385 = vpop.permute.xlu0 %1384
      %1386 = vrot.lane.b32.xlu0 %v610, 48
      %v1387 = vpop.permute.xlu0 %1386
      %1388 = vrot.lane.b32.xlu0 %v611, 48
      %v1389 = vpop.permute.xlu0 %1388
      %1390 = vrot.lane.b32.xlu0 %v612, 48
      %v1391 = vpop.permute.xlu0 %1390
      %1392 = vrot.lane.b32.xlu0 %v613, 48
      %v1393 = vpop.permute.xlu0 %1392
      %1394 = vrot.lane.b32.xlu0 %v614, 48
      %v1395 = vpop.permute.xlu0 %1394
      %1396 = vrot.lane.b32.xlu0 %v615, 48
      %v1397 = vpop.permute.xlu0 %1396
      %1398 = vrot.lane.b32.xlu0 %v616, 48
      %v1399 = vpop.permute.xlu0 %1398
      %1400 = vrot.lane.b32.xlu0 %v617, 48
      %v1401 = vpop.permute.xlu0 %1400
      %1402 = vrot.lane.b32.xlu0 %v618, 48
      %v1403 = vpop.permute.xlu0 %1402
      %1404 = vrot.lane.b32.xlu0 %v619, 48
      %v1405 = vpop.permute.xlu0 %1404
      %1406 = vrot.lane.b32.xlu0 %v620, 48
      %v1407 = vpop.permute.xlu0 %1406
      %1408 = vrot.lane.b32.xlu0 %v621, 48
      %v1409 = vpop.permute.xlu0 %1408
      %1410 = vrot.lane.b32.xlu0 %v622, 48
      %v1411 = vpop.permute.xlu0 %1410
      %1412 = vrot.lane.b32.xlu0 %v623, 48
      %v1413 = vpop.permute.xlu0 %1412
      %1414 = vrot.lane.b32.xlu0 %v624, 48
      %v1415 = vpop.permute.xlu0 %1414
      %1416 = vrot.lane.b32.xlu0 %v625, 48
      %v1417 = vpop.permute.xlu0 %1416
      %1418 = vrot.lane.b32.xlu0 %v626, 48
      %v1419 = vpop.permute.xlu0 %1418
      %1420 = vrot.lane.b32.xlu0 %v627, 48
      %v1421 = vpop.permute.xlu0 %1420
      %1422 = vrot.lane.b32.xlu0 %v628, 48
      %v1423 = vpop.permute.xlu0 %1422
      %1424 = vrot.lane.b32.xlu0 %v629, 48
      %v1425 = vpop.permute.xlu0 %1424
      %1426 = vrot.lane.b32.xlu0 %v630, 48
      %v1427 = vpop.permute.xlu0 %1426
      %1428 = vrot.lane.b32.xlu0 %v631, 48
      %v1429 = vpop.permute.xlu0 %1428
      %1430 = vrot.lane.b32.xlu0 %v632, 48
      %v1431 = vpop.permute.xlu0 %1430
      %1432 = vrot.lane.b32.xlu0 %v633, 48
      %v1433 = vpop.permute.xlu0 %1432
      %1498 = vrot.lane.b32.xlu0 %v634, 56
      %v1499 = vpop.permute.xlu0 %1498
      %1500 = vrot.lane.b32.xlu0 %v635, 56
      %v1501 = vpop.permute.xlu0 %1500
      %1502 = vrot.lane.b32.xlu0 %v636, 56
      %v1503 = vpop.permute.xlu0 %1502
      %1504 = vrot.lane.b32.xlu0 %v637, 56
      %v1505 = vpop.permute.xlu0 %1504
      %1506 = vrot.lane.b32.xlu0 %v638, 56
      %v1507 = vpop.permute.xlu0 %1506
      %1508 = vrot.lane.b32.xlu0 %v639, 56
      %v1509 = vpop.permute.xlu0 %1508
      %1510 = vrot.lane.b32.xlu0 %v640, 56
      %v1511 = vpop.permute.xlu0 %1510
      %1512 = vrot.lane.b32.xlu0 %v641, 56
      %v1513 = vpop.permute.xlu0 %1512
      %1514 = vrot.lane.b32.xlu0 %v642, 56
      %v1515 = vpop.permute.xlu0 %1514
      %1516 = vrot.lane.b32.xlu0 %v643, 56
      %v1517 = vpop.permute.xlu0 %1516
      %1518 = vrot.lane.b32.xlu0 %v644, 56
      %v1519 = vpop.permute.xlu0 %1518
      %1520 = vrot.lane.b32.xlu0 %v645, 56
      %v1521 = vpop.permute.xlu0 %1520
      %1522 = vrot.lane.b32.xlu0 %v646, 56
      %v1523 = vpop.permute.xlu0 %1522
      %1524 = vrot.lane.b32.xlu0 %v647, 56
      %v1525 = vpop.permute.xlu0 %1524
      %1526 = vrot.lane.b32.xlu0 %v648, 56
      %v1527 = vpop.permute.xlu0 %1526
      %1528 = vrot.lane.b32.xlu0 %v649, 56
      %v1529 = vpop.permute.xlu0 %1528
      %1530 = vrot.lane.b32.xlu0 %v650, 56
      %v1531 = vpop.permute.xlu0 %1530
      %1532 = vrot.lane.b32.xlu0 %v651, 56
      %v1533 = vpop.permute.xlu0 %1532
      %1534 = vrot.lane.b32.xlu0 %v652, 56
      %v1535 = vpop.permute.xlu0 %1534
      %1536 = vrot.lane.b32.xlu0 %v653, 56
      %v1537 = vpop.permute.xlu0 %1536
      %1538 = vrot.lane.b32.xlu0 %v654, 56
      %v1539 = vpop.permute.xlu0 %1538
      %1540 = vrot.lane.b32.xlu0 %v655, 56
      %v1541 = vpop.permute.xlu0 %1540
      %1542 = vrot.lane.b32.xlu0 %v656, 56
      %v1543 = vpop.permute.xlu0 %1542
      %1544 = vrot.lane.b32.xlu0 %v657, 56
      %v1545 = vpop.permute.xlu0 %1544
      %1546 = vrot.lane.b32.xlu0 %v658, 56
      %v1547 = vpop.permute.xlu0 %1546
      %1548 = vrot.lane.b32.xlu0 %v659, 56
      %v1549 = vpop.permute.xlu0 %1548
      %1550 = vrot.lane.b32.xlu0 %v660, 56
      %v1551 = vpop.permute.xlu0 %1550
      %1552 = vrot.lane.b32.xlu0 %v661, 56
      %v1553 = vpop.permute.xlu0 %1552
      %1554 = vrot.lane.b32.xlu0 %v662, 56
      %v1555 = vpop.permute.xlu0 %1554
      %1556 = vrot.lane.b32.xlu0 %v663, 56
      %v1557 = vpop.permute.xlu0 %1556
      %1558 = vrot.lane.b32.xlu0 %v664, 56
      %v1559 = vpop.permute.xlu0 %1558
      %1560 = vrot.lane.b32.xlu0 %v665, 56
      %v1561 = vpop.permute.xlu0 %1560
      %1626 = vrot.lane.b32.xlu0 %v666, 64
      %v1627 = vpop.permute.xlu0 %1626
      %1628 = vrot.lane.b32.xlu0 %v667, 64
      %v1629 = vpop.permute.xlu0 %1628
      %1630 = vrot.lane.b32.xlu0 %v668, 64
      %v1631 = vpop.permute.xlu0 %1630
      %1632 = vrot.lane.b32.xlu0 %v669, 64
      %v1633 = vpop.permute.xlu0 %1632
      %1634 = vrot.lane.b32.xlu0 %v670, 64
      %v1635 = vpop.permute.xlu0 %1634
      %1636 = vrot.lane.b32.xlu0 %v671, 64
      %v1637 = vpop.permute.xlu0 %1636
      %1638 = vrot.lane.b32.xlu0 %v672, 64
      %v1639 = vpop.permute.xlu0 %1638
      %1640 = vrot.lane.b32.xlu0 %v673, 64
      %v1641 = vpop.permute.xlu0 %1640
      %1642 = vrot.lane.b32.xlu0 %v674, 64
      %v1643 = vpop.permute.xlu0 %1642
      %1644 = vrot.lane.b32.xlu0 %v675, 64
      %v1645 = vpop.permute.xlu0 %1644
      %1646 = vrot.lane.b32.xlu0 %v676, 64
      %v1647 = vpop.permute.xlu0 %1646
      %1648 = vrot.lane.b32.xlu0 %v677, 64
      %v1649 = vpop.permute.xlu0 %1648
      %1650 = vrot.lane.b32.xlu0 %v678, 64
      %v1651 = vpop.permute.xlu0 %1650
      %1652 = vrot.lane.b32.xlu0 %v679, 64
      %v1653 = vpop.permute.xlu0 %1652
      %1654 = vrot.lane.b32.xlu0 %v680, 64
      %v1655 = vpop.permute.xlu0 %1654
      %1656 = vrot.lane.b32.xlu0 %v681, 64
      %v1657 = vpop.permute.xlu0 %1656
      %1658 = vrot.lane.b32.xlu0 %v682, 64
      %v1659 = vpop.permute.xlu0 %1658
      %1660 = vrot.lane.b32.xlu0 %v683, 64
      %v1661 = vpop.permute.xlu0 %1660
      %1662 = vrot.lane.b32.xlu0 %v684, 64
      %v1663 = vpop.permute.xlu0 %1662
      %1664 = vrot.lane.b32.xlu0 %v685, 64
      %v1665 = vpop.permute.xlu0 %1664
      %1666 = vrot.lane.b32.xlu0 %v686, 64
      %v1667 = vpop.permute.xlu0 %1666
      %1668 = vrot.lane.b32.xlu0 %v687, 64
      %v1669 = vpop.permute.xlu0 %1668
      %1670 = vrot.lane.b32.xlu0 %v688, 64
      %v1671 = vpop.permute.xlu0 %1670
      %1672 = vrot.lane.b32.xlu0 %v689, 64
      %v1673 = vpop.permute.xlu0 %1672
      %1674 = vrot.lane.b32.xlu0 %v690, 64
      %v1675 = vpop.permute.xlu0 %1674
      %1676 = vrot.lane.b32.xlu0 %v691, 64
      %v1677 = vpop.permute.xlu0 %1676
      %1678 = vrot.lane.b32.xlu0 %v692, 64
      %v1679 = vpop.permute.xlu0 %1678
      %1680 = vrot.lane.b32.xlu0 %v693, 64
      %v1681 = vpop.permute.xlu0 %1680
      %1682 = vrot.lane.b32.xlu0 %v694, 64
      %v1683 = vpop.permute.xlu0 %1682
      %1684 = vrot.lane.b32.xlu0 %v695, 64
      %v1685 = vpop.permute.xlu0 %1684
      %1686 = vrot.lane.b32.xlu0 %v696, 64
      %v1687 = vpop.permute.xlu0 %1686
      %1688 = vrot.lane.b32.xlu0 %v697, 64
      %v1689 = vpop.permute.xlu0 %1688
      %v1722 = vsel %vm359, %v409, %v731
      %v1723 = vsel %vm359, %v410, %v733
      %v1724 = vsel %vm359, %v411, %v735
      %v1725 = vsel %vm359, %v412, %v737
      %v1726 = vsel %vm359, %v413, %v739
      %v1727 = vsel %vm359, %v414, %v741
      %v1728 = vsel %vm359, %v415, %v743
      %v1729 = vsel %vm359, %v416, %v745
      %v1730 = vsel %vm359, %v417, %v747
      %v1731 = vsel %vm359, %v418, %v749
      %v1732 = vsel %vm359, %v419, %v751
      %v1733 = vsel %vm359, %v420, %v753
      %v1734 = vsel %vm359, %v421, %v755
      %v1735 = vsel %vm359, %v422, %v757
      %v1736 = vsel %vm359, %v423, %v759
      %v1737 = vsel %vm359, %v424, %v761
      %v1738 = vsel %vm359, %v425, %v763
      %v1739 = vsel %vm359, %v426, %v765
      %v1740 = vsel %vm359, %v427, %v767
      %v1741 = vsel %vm359, %v428, %v769
      %v1742 = vsel %vm359, %v429, %v771
      %v1743 = vsel %vm359, %v430, %v773
      %v1744 = vsel %vm359, %v431, %v775
      %v1745 = vsel %vm359, %v432, %v777
      %v1746 = vsel %vm359, %v433, %v779
      %v1747 = vsel %vm359, %v434, %v781
      %v1748 = vsel %vm359, %v435, %v783
      %v1749 = vsel %vm359, %v436, %v785
      %v1750 = vsel %vm359, %v437, %v787
      %v1751 = vsel %vm359, %v438, %v789
      %v1752 = vsel %vm359, %v439, %v791
      %v1753 = vsel %vm359, %v440, %v793
      %vm1754 = vcmask 130048
      %v1755 = vsel %vm1754, %v1722, %v859
      %v1756 = vsel %vm1754, %v1723, %v861
      %v1757 = vsel %vm1754, %v1724, %v863
      %v1758 = vsel %vm1754, %v1725, %v865
      %v1759 = vsel %vm1754, %v1726, %v867
      %v1760 = vsel %vm1754, %v1727, %v869
      %v1761 = vsel %vm1754, %v1728, %v871
      %v1762 = vsel %vm1754, %v1729, %v873
      %v1763 = vsel %vm1754, %v1730, %v875
      %v1764 = vsel %vm1754, %v1731, %v877
      %v1765 = vsel %vm1754, %v1732, %v879
      %v1766 = vsel %vm1754, %v1733, %v881
      %v1767 = vsel %vm1754, %v1734, %v883
      %v1768 = vsel %vm1754, %v1735, %v885
      %v1769 = vsel %vm1754, %v1736, %v887
      %v1770 = vsel %vm1754, %v1737, %v889
      %v1771 = vsel %vm1754, %v1738, %v891
      %v1772 = vsel %vm1754, %v1739, %v893
      %v1773 = vsel %vm1754, %v1740, %v895
      %v1774 = vsel %vm1754, %v1741, %v897
      %v1775 = vsel %vm1754, %v1742, %v899
      %v1776 = vsel %vm1754, %v1743, %v901
      %v1777 = vsel %vm1754, %v1744, %v903
      %v1778 = vsel %vm1754, %v1745, %v905
      %v1779 = vsel %vm1754, %v1746, %v907
      %v1780 = vsel %vm1754, %v1747, %v909
      %v1781 = vsel %vm1754, %v1748, %v911
      %v1782 = vsel %vm1754, %v1749, %v913
      %v1783 = vsel %vm1754, %v1750, %v915
      %v1784 = vsel %vm1754, %v1751, %v917
      %v1785 = vsel %vm1754, %v1752, %v919
      %v1786 = vsel %vm1754, %v1753, %v921
      %vm1787 = vcmask 195584
      %v1788 = vsel %vm1787, %v1755, %v987
      %v1789 = vsel %vm1787, %v1756, %v989
      %v1790 = vsel %vm1787, %v1757, %v991
      %v1791 = vsel %vm1787, %v1758, %v993
      %v1792 = vsel %vm1787, %v1759, %v995
      %v1793 = vsel %vm1787, %v1760, %v997
      %v1794 = vsel %vm1787, %v1761, %v999
      %v1795 = vsel %vm1787, %v1762, %v1001
      %v1796 = vsel %vm1787, %v1763, %v1003
      %v1797 = vsel %vm1787, %v1764, %v1005
      %v1798 = vsel %vm1787, %v1765, %v1007
      %v1799 = vsel %vm1787, %v1766, %v1009
      %v1800 = vsel %vm1787, %v1767, %v1011
      %v1801 = vsel %vm1787, %v1768, %v1013
      %v1802 = vsel %vm1787, %v1769, %v1015
      %v1803 = vsel %vm1787, %v1770, %v1017
      %v1804 = vsel %vm1787, %v1771, %v1019
      %v1805 = vsel %vm1787, %v1772, %v1021
      %v1806 = vsel %vm1787, %v1773, %v1023
      %v1807 = vsel %vm1787, %v1774, %v1025
      %v1808 = vsel %vm1787, %v1775, %v1027
      %v1809 = vsel %vm1787, %v1776, %v1029
      %v1810 = vsel %vm1787, %v1777, %v1031
      %v1811 = vsel %vm1787, %v1778, %v1033
      %v1812 = vsel %vm1787, %v1779, %v1035
      %v1813 = vsel %vm1787, %v1780, %v1037
      %v1814 = vsel %vm1787, %v1781, %v1039
      %v1815 = vsel %vm1787, %v1782, %v1041
      %v1816 = vsel %vm1787, %v1783, %v1043
      %v1817 = vsel %vm1787, %v1784, %v1045
      %v1818 = vsel %vm1787, %v1785, %v1047
      %v1819 = vsel %vm1787, %v1786, %v1049
      %vm1820 = vcmask 261120
      %v1821 = vsel %vm1820, %v1788, %v1115
      %v1822 = vsel %vm1820, %v1789, %v1117
      %v1823 = vsel %vm1820, %v1790, %v1119
      %v1824 = vsel %vm1820, %v1791, %v1121
      %v1825 = vsel %vm1820, %v1792, %v1123
      %v1826 = vsel %vm1820, %v1793, %v1125
      %v1827 = vsel %vm1820, %v1794, %v1127
      %v1828 = vsel %vm1820, %v1795, %v1129
      %v1829 = vsel %vm1820, %v1796, %v1131
      %v1830 = vsel %vm1820, %v1797, %v1133
      %v1831 = vsel %vm1820, %v1798, %v1135
      %v1832 = vsel %vm1820, %v1799, %v1137
      %v1833 = vsel %vm1820, %v1800, %v1139
      %v1834 = vsel %vm1820, %v1801, %v1141
      %v1835 = vsel %vm1820, %v1802, %v1143
      %v1836 = vsel %vm1820, %v1803, %v1145
      %v1837 = vsel %vm1820, %v1804, %v1147
      %v1838 = vsel %vm1820, %v1805, %v1149
      %v1839 = vsel %vm1820, %v1806, %v1151
      %v1840 = vsel %vm1820, %v1807, %v1153
      %v1841 = vsel %vm1820, %v1808, %v1155
      %v1842 = vsel %vm1820, %v1809, %v1157
      %v1843 = vsel %vm1820, %v1810, %v1159
      %v1844 = vsel %vm1820, %v1811, %v1161
      %v1845 = vsel %vm1820, %v1812, %v1163
      %v1846 = vsel %vm1820, %v1813, %v1165
      %v1847 = vsel %vm1820, %v1814, %v1167
      %v1848 = vsel %vm1820, %v1815, %v1169
      %v1849 = vsel %vm1820, %v1816, %v1171
      %v1850 = vsel %vm1820, %v1817, %v1173
      %v1851 = vsel %vm1820, %v1818, %v1175
      %v1852 = vsel %vm1820, %v1819, %v1177
      %vm1853 = vcmask 326656
      %v1854 = vsel %vm1853, %v1821, %v1243
      %v1855 = vsel %vm1853, %v1822, %v1245
      %v1856 = vsel %vm1853, %v1823, %v1247
      %v1857 = vsel %vm1853, %v1824, %v1249
      %v1858 = vsel %vm1853, %v1825, %v1251
      %v1859 = vsel %vm1853, %v1826, %v1253
      %v1860 = vsel %vm1853, %v1827, %v1255
      %v1861 = vsel %vm1853, %v1828, %v1257
      %v1862 = vsel %vm1853, %v1829, %v1259
      %v1863 = vsel %vm1853, %v1830, %v1261
      %v1864 = vsel %vm1853, %v1831, %v1263
      %v1865 = vsel %vm1853, %v1832, %v1265
      %v1866 = vsel %vm1853, %v1833, %v1267
      %v1867 = vsel %vm1853, %v1834, %v1269
      %v1868 = vsel %vm1853, %v1835, %v1271
      %v1869 = vsel %vm1853, %v1836, %v1273
      %v1870 = vsel %vm1853, %v1837, %v1275
      %v1871 = vsel %vm1853, %v1838, %v1277
      %v1872 = vsel %vm1853, %v1839, %v1279
      %v1873 = vsel %vm1853, %v1840, %v1281
      %v1874 = vsel %vm1853, %v1841, %v1283
      %v1875 = vsel %vm1853, %v1842, %v1285
      %v1876 = vsel %vm1853, %v1843, %v1287
      %v1877 = vsel %vm1853, %v1844, %v1289
      %v1878 = vsel %vm1853, %v1845, %v1291
      %v1879 = vsel %vm1853, %v1846, %v1293
      %v1880 = vsel %vm1853, %v1847, %v1295
      %v1881 = vsel %vm1853, %v1848, %v1297
      %v1882 = vsel %vm1853, %v1849, %v1299
      %v1883 = vsel %vm1853, %v1850, %v1301
      %v1884 = vsel %vm1853, %v1851, %v1303
      %v1885 = vsel %vm1853, %v1852, %v1305
      %vm1886 = vcmask 392192
      %v1887 = vsel %vm1886, %v1854, %v1371
      %v1888 = vsel %vm1886, %v1855, %v1373
      %v1889 = vsel %vm1886, %v1856, %v1375
      %v1890 = vsel %vm1886, %v1857, %v1377
      %v1891 = vsel %vm1886, %v1858, %v1379
      %v1892 = vsel %vm1886, %v1859, %v1381
      %v1893 = vsel %vm1886, %v1860, %v1383
      %v1894 = vsel %vm1886, %v1861, %v1385
      %v1895 = vsel %vm1886, %v1862, %v1387
      %v1896 = vsel %vm1886, %v1863, %v1389
      %v1897 = vsel %vm1886, %v1864, %v1391
      %v1898 = vsel %vm1886, %v1865, %v1393
      %v1899 = vsel %vm1886, %v1866, %v1395
      %v1900 = vsel %vm1886, %v1867, %v1397
      %v1901 = vsel %vm1886, %v1868, %v1399
      %v1902 = vsel %vm1886, %v1869, %v1401
      %v1903 = vsel %vm1886, %v1870, %v1403
      %v1904 = vsel %vm1886, %v1871, %v1405
      %v1905 = vsel %vm1886, %v1872, %v1407
      %v1906 = vsel %vm1886, %v1873, %v1409
      %v1907 = vsel %vm1886, %v1874, %v1411
      %v1908 = vsel %vm1886, %v1875, %v1413
      %v1909 = vsel %vm1886, %v1876, %v1415
      %v1910 = vsel %vm1886, %v1877, %v1417
      %v1911 = vsel %vm1886, %v1878, %v1419
      %v1912 = vsel %vm1886, %v1879, %v1421
      %v1913 = vsel %vm1886, %v1880, %v1423
      %v1914 = vsel %vm1886, %v1881, %v1425
      %v1915 = vsel %vm1886, %v1882, %v1427
      %v1916 = vsel %vm1886, %v1883, %v1429
      %v1917 = vsel %vm1886, %v1884, %v1431
      %v1918 = vsel %vm1886, %v1885, %v1433
      %vm1919 = vcmask 457728
      %v1920 = vsel %vm1919, %v1887, %v1499
      %v1921 = vsel %vm1919, %v1888, %v1501
      %v1922 = vsel %vm1919, %v1889, %v1503
      %v1923 = vsel %vm1919, %v1890, %v1505
      %v1924 = vsel %vm1919, %v1891, %v1507
      %v1925 = vsel %vm1919, %v1892, %v1509
      %v1926 = vsel %vm1919, %v1893, %v1511
      %v1927 = vsel %vm1919, %v1894, %v1513
      %v1928 = vsel %vm1919, %v1895, %v1515
      %v1929 = vsel %vm1919, %v1896, %v1517
      %v1930 = vsel %vm1919, %v1897, %v1519
      %v1931 = vsel %vm1919, %v1898, %v1521
      %v1932 = vsel %vm1919, %v1899, %v1523
      %v1933 = vsel %vm1919, %v1900, %v1525
      %v1934 = vsel %vm1919, %v1901, %v1527
      %v1935 = vsel %vm1919, %v1902, %v1529
      %v1936 = vsel %vm1919, %v1903, %v1531
      %v1937 = vsel %vm1919, %v1904, %v1533
      %v1938 = vsel %vm1919, %v1905, %v1535
      %v1939 = vsel %vm1919, %v1906, %v1537
      %v1940 = vsel %vm1919, %v1907, %v1539
      %v1941 = vsel %vm1919, %v1908, %v1541
      %v1942 = vsel %vm1919, %v1909, %v1543
      %v1943 = vsel %vm1919, %v1910, %v1545
      %v1944 = vsel %vm1919, %v1911, %v1547
      %v1945 = vsel %vm1919, %v1912, %v1549
      %v1946 = vsel %vm1919, %v1913, %v1551
      %v1947 = vsel %vm1919, %v1914, %v1553
      %v1948 = vsel %vm1919, %v1915, %v1555
      %v1949 = vsel %vm1919, %v1916, %v1557
      %v1950 = vsel %vm1919, %v1917, %v1559
      %v1951 = vsel %vm1919, %v1918, %v1561
      %vm1952 = vcmask 523264
      %v1953 = vsel %vm1952, %v1920, %v1627
      %v1954 = vsel %vm1952, %v1921, %v1629
      %v1955 = vsel %vm1952, %v1922, %v1631
      %v1956 = vsel %vm1952, %v1923, %v1633
      %v1957 = vsel %vm1952, %v1924, %v1635
      %v1958 = vsel %vm1952, %v1925, %v1637
      %v1959 = vsel %vm1952, %v1926, %v1639
      %v1960 = vsel %vm1952, %v1927, %v1641
      %v1961 = vsel %vm1952, %v1928, %v1643
      %v1962 = vsel %vm1952, %v1929, %v1645
      %v1963 = vsel %vm1952, %v1930, %v1647
      %v1964 = vsel %vm1952, %v1931, %v1649
      %v1965 = vsel %vm1952, %v1932, %v1651
      %v1966 = vsel %vm1952, %v1933, %v1653
      %v1967 = vsel %vm1952, %v1934, %v1655
      %v1968 = vsel %vm1952, %v1935, %v1657
      %v1969 = vsel %vm1952, %v1936, %v1659
      %v1970 = vsel %vm1952, %v1937, %v1661
      %v1971 = vsel %vm1952, %v1938, %v1663
      %v1972 = vsel %vm1952, %v1939, %v1665
      %v1973 = vsel %vm1952, %v1940, %v1667
      %v1974 = vsel %vm1952, %v1941, %v1669
      %v1975 = vsel %vm1952, %v1942, %v1671
      %v1976 = vsel %vm1952, %v1943, %v1673
      %v1977 = vsel %vm1952, %v1944, %v1675
      %v1978 = vsel %vm1952, %v1945, %v1677
      %v1979 = vsel %vm1952, %v1946, %v1679
      %v1980 = vsel %vm1952, %v1947, %v1681
      %v1981 = vsel %vm1952, %v1948, %v1683
      %v1982 = vsel %vm1952, %v1949, %v1685
      %v1983 = vsel %vm1952, %v1950, %v1687
      %v1984 = vsel %vm1952, %v1951, %v1689
      %v1985 = vld [vmem:[%s280] sm:$0xff]
      %v1986 = vld [vmem:[%s280 + $0x8] sm:$0xff]
      %v1987 = vld [vmem:[%s280 + $0x10] sm:$0xff]
      %v1988 = vld [vmem:[%s280 + $0x18] sm:$0xff]
      %v1989 = vld [vmem:[%s280 + $0x20] sm:$0xff]
      %v1990 = vld [vmem:[%s280 + $0x28] sm:$0xff]
      %v1991 = vld [vmem:[%s280 + $0x30] sm:$0xff]
      %v1992 = vld [vmem:[%s280 + $0x38] sm:$0xff]
      %v1993 = vld [vmem:[%s280 + $0x40] sm:$0xff]
      %vm1994 = vcmask 588800
      %v1996 = vsel %vm1994, %v1953, 0
      %v1999 = vsel %vm1994, %v1954, 0
      %v2002 = vsel %vm1994, %v1955, 0
      %v2005 = vsel %vm1994, %v1956, 0
      %v2008 = vsel %vm1994, %v1957, 0
      %v2011 = vsel %vm1994, %v1958, 0
      %v2014 = vsel %vm1994, %v1959, 0
      %v2017 = vsel %vm1994, %v1960, 0
      %v2020 = vsel %vm1994, %v1961, 0
      %v2023 = vsel %vm1994, %v1962, 0
      %v2026 = vsel %vm1994, %v1963, 0
      %v2029 = vsel %vm1994, %v1964, 0
      %v2032 = vsel %vm1994, %v1965, 0
      %v2035 = vsel %vm1994, %v1966, 0
      %v2038 = vsel %vm1994, %v1967, 0
      %v2041 = vsel %vm1994, %v1968, 0
      %v2044 = vsel %vm1994, %v1969, 0
      %v2047 = vsel %vm1994, %v1970, 0
      %v2050 = vsel %vm1994, %v1971, 0
      %v2053 = vsel %vm1994, %v1972, 0
      %v2056 = vsel %vm1994, %v1973, 0
      %v2059 = vsel %vm1994, %v1974, 0
      %v2062 = vsel %vm1994, %v1975, 0
      %v2065 = vsel %vm1994, %v1976, 0
      %v2068 = vsel %vm1994, %v1977, 0
      %v2071 = vsel %vm1994, %v1978, 0
      %v2074 = vsel %vm1994, %v1979, 0
      %v2077 = vsel %vm1994, %v1980, 0
      %v2080 = vsel %vm1994, %v1981, 0
      %v2083 = vsel %vm1994, %v1982, 0
      %v2086 = vsel %vm1994, %v1983, 0
      %v2089 = vsel %vm1994, %v1984, 0
      %2091 = vmatprep.subr.mxu0 0.0
      %2092 = vmatpush1.msra.mxu0 0.0
      %2093 = vmatprep.subr.mxu0 0.0
      %2094 = vmatpush1.msra.mxu0 0.0
      %2095 = vmatprep.subr.mxu0 0.0
      %2096 = vmatpush1.msra.mxu0 0.0
      %2097 = vmatprep.subr.mxu0 0.0
      %2098 = vmatpush1.msra.mxu0 0.0
      %2099 = vmatprep.subr.mxu0 0.0
      %2100 = vmatpush1.msra.mxu0 0.0
      %2101 = vmatprep.subr.mxu0 0.0
      %2102 = vmatpush1.msra.mxu0 0.0
      %2103 = vmatprep.subr.mxu0 0.0
      %2104 = vmatpush1.msra.mxu0 0.0
      %2105 = vmatprep.subr.mxu0 0.0
      %2106 = vmatpush1.msra.mxu0 %v1993
      %2107 = vmatprep.subr.mxu0 0.0
      %2108 = vmatpush1.msra.mxu0 %v1992
      %2109 = vmatprep.subr.mxu0 0.0
      %2110 = vmatpush1.msra.mxu0 %v1991
      %2111 = vmatprep.subr.mxu0 0.0
      %2112 = vmatpush1.msra.mxu0 %v1990
      %2113 = vmatprep.subr.mxu0 0.0
      %2114 = vmatpush1.msra.mxu0 %v1989
      %2115 = vmatprep.subr.mxu0 0.0
      %2116 = vmatpush1.msra.mxu0 %v1988
      %2117 = vmatprep.subr.mxu0 0.0
      %2118 = vmatpush1.msra.mxu0 %v1987
      %2119 = vmatprep.subr.mxu0 0.0
      %2120 = vmatpush1.msra.mxu0 %v1986
      %2121 = vmatprep.subr.mxu0 0.0
      %2122 = vmatpush1.msra.mxu0 %v1985
      %2123 = vmatprep.subr.mxu0 0.0
      %2124 = vmatpush2.msra.mxu0 0.0
      %2125 = vmatprep.subr.mxu0 0.0
      %2126 = vmatpush2.msra.mxu0 0.0
      %2127 = vmatprep.subr.mxu0 0.0
      %2128 = vmatpush2.msra.mxu0 0.0
      %2129 = vmatprep.subr.mxu0 0.0
      %2130 = vmatpush2.msra.mxu0 0.0
      %2131 = vmatprep.subr.mxu0 0.0
      %2132 = vmatpush2.msra.mxu0 0.0
      %2133 = vmatprep.subr.mxu0 0.0
      %2134 = vmatpush2.msra.mxu0 0.0
      %2135 = vmatprep.subr.mxu0 0.0
      %2136 = vmatpush2.msra.mxu0 0.0
      %2137 = vmatprep.subr.mxu0 0.0
      %2138 = vmatpush2.msra.mxu0 0.0
      %2139 = vmatprep.subr.mxu0 0.0
      %2140 = vmatpush2.msra.mxu0 0.0
      %2141 = vmatprep.subr.mxu0 0.0
      %2142 = vmatpush2.msra.mxu0 0.0
      %2143 = vmatprep.subr.mxu0 0.0
      %2144 = vmatpush2.msra.mxu0 0.0
      %2145 = vmatprep.subr.mxu0 0.0
      %2146 = vmatpush2.msra.mxu0 0.0
      %2147 = vmatprep.subr.mxu0 0.0
      %2148 = vmatpush2.msra.mxu0 0.0
      %2149 = vmatprep.subr.mxu0 0.0
      %2150 = vmatpush2.msra.mxu0 0.0
      %2151 = vmatprep.subr.mxu0 0.0
      %2152 = vmatpush2.msra.mxu0 0.0
      %2153 = vmatprep.subr.mxu0 0.0
      %2154 = vmatpush2.msra.mxu0 0.0
      %2155 = vmatprep.mubr.f32.mxu0 0.0
      %2156 = vmatmul.mubr.f32.gmra.mxu0 %v1996
      %v2157 = vpop.f32.mrf.mxu0
      %v2158 = vadd.f32 0.0, %v2157
      %v2159 = vpop.f32.mrf.mxu0
      %2160 = vmatprep.mubr.f32.mxu0 0.0
      %2161 = vmatmul.mubr.f32.gmra.mxu0 %v1999
      %v2162 = vpop.f32.mrf.mxu0
      %v2163 = vadd.f32 0.0, %v2162
      %v2164 = vpop.f32.mrf.mxu0
      %2165 = vmatprep.mubr.f32.mxu0 0.0
      %2166 = vmatmul.mubr.f32.gmra.mxu0 %v2002
      %v2167 = vpop.f32.mrf.mxu0
      %v2168 = vadd.f32 0.0, %v2167
      %v2169 = vpop.f32.mrf.mxu0
      %2170 = vmatprep.mubr.f32.mxu0 0.0
      %2171 = vmatmul.mubr.f32.gmra.mxu0 %v2005
      %v2172 = vpop.f32.mrf.mxu0
      %v2173 = vadd.f32 0.0, %v2172
      %v2174 = vpop.f32.mrf.mxu0
      %2175 = vmatprep.mubr.f32.mxu0 0.0
      %2176 = vmatmul.mubr.f32.gmra.mxu0 %v2008
      %v2177 = vpop.f32.mrf.mxu0
      %v2178 = vadd.f32 0.0, %v2177
      %v2179 = vpop.f32.mrf.mxu0
      %2180 = vmatprep.mubr.f32.mxu0 0.0
      %2181 = vmatmul.mubr.f32.gmra.mxu0 %v2011
      %v2182 = vpop.f32.mrf.mxu0
      %v2183 = vadd.f32 0.0, %v2182
      %v2184 = vpop.f32.mrf.mxu0
      %2185 = vmatprep.mubr.f32.mxu0 0.0
      %2186 = vmatmul.mubr.f32.gmra.mxu0 %v2014
      %v2187 = vpop.f32.mrf.mxu0
      %v2188 = vadd.f32 0.0, %v2187
      %v2189 = vpop.f32.mrf.mxu0
      %2190 = vmatprep.mubr.f32.mxu0 0.0
      %2191 = vmatmul.mubr.f32.gmra.mxu0 %v2017
      %v2192 = vpop.f32.mrf.mxu0
      %v2193 = vadd.f32 0.0, %v2192
      %v2194 = vpop.f32.mrf.mxu0
      %2195 = vmatprep.mubr.f32.mxu0 0.0
      %2196 = vmatmul.mubr.f32.gmra.mxu0 %v2020
      %v2197 = vpop.f32.mrf.mxu0
      %v2198 = vadd.f32 0.0, %v2197
      %v2199 = vpop.f32.mrf.mxu0
      %2200 = vmatprep.mubr.f32.mxu0 0.0
      %2201 = vmatmul.mubr.f32.gmra.mxu0 %v2023
      %v2202 = vpop.f32.mrf.mxu0
      %v2203 = vadd.f32 0.0, %v2202
      %v2204 = vpop.f32.mrf.mxu0
      %2205 = vmatprep.mubr.f32.mxu0 0.0
      %2206 = vmatmul.mubr.f32.gmra.mxu0 %v2026
      %v2207 = vpop.f32.mrf.mxu0
      %v2208 = vadd.f32 0.0, %v2207
      %v2209 = vpop.f32.mrf.mxu0
      %2210 = vmatprep.mubr.f32.mxu0 0.0
      %2211 = vmatmul.mubr.f32.gmra.mxu0 %v2029
      %v2212 = vpop.f32.mrf.mxu0
      %v2213 = vadd.f32 0.0, %v2212
      %v2214 = vpop.f32.mrf.mxu0
      %2215 = vmatprep.mubr.f32.mxu0 0.0
      %2216 = vmatmul.mubr.f32.gmra.mxu0 %v2032
      %v2217 = vpop.f32.mrf.mxu0
      %v2218 = vadd.f32 0.0, %v2217
      %v2219 = vpop.f32.mrf.mxu0
      %2220 = vmatprep.mubr.f32.mxu0 0.0
      %2221 = vmatmul.mubr.f32.gmra.mxu0 %v2035
      %v2222 = vpop.f32.mrf.mxu0
      %v2223 = vadd.f32 0.0, %v2222
      %v2224 = vpop.f32.mrf.mxu0
      %2225 = vmatprep.mubr.f32.mxu0 0.0
      %2226 = vmatmul.mubr.f32.gmra.mxu0 %v2038
      %v2227 = vpop.f32.mrf.mxu0
      %v2228 = vadd.f32 0.0, %v2227
      %v2229 = vpop.f32.mrf.mxu0
      %2230 = vmatprep.mubr.f32.mxu0 0.0
      %2231 = vmatmul.mubr.f32.gmra.mxu0 %v2041
      %v2232 = vpop.f32.mrf.mxu0
      %v2233 = vadd.f32 0.0, %v2232
      %v2234 = vpop.f32.mrf.mxu0
      %2235 = vmatprep.mubr.f32.mxu0 0.0
      %2236 = vmatmul.mubr.f32.gmra.mxu0 %v2044
      %v2237 = vpop.f32.mrf.mxu0
      %v2238 = vadd.f32 0.0, %v2237
      %v2239 = vpop.f32.mrf.mxu0
      %2240 = vmatprep.mubr.f32.mxu0 0.0
      %2241 = vmatmul.mubr.f32.gmra.mxu0 %v2047
      %v2242 = vpop.f32.mrf.mxu0
      %v2243 = vadd.f32 0.0, %v2242
      %v2244 = vpop.f32.mrf.mxu0
      %2245 = vmatprep.mubr.f32.mxu0 0.0
      %2246 = vmatmul.mubr.f32.gmra.mxu0 %v2050
      %v2247 = vpop.f32.mrf.mxu0
      %v2248 = vadd.f32 0.0, %v2247
      %v2249 = vpop.f32.mrf.mxu0
      %2250 = vmatprep.mubr.f32.mxu0 0.0
      %2251 = vmatmul.mubr.f32.gmra.mxu0 %v2053
      %v2252 = vpop.f32.mrf.mxu0
      %v2253 = vadd.f32 0.0, %v2252
      %v2254 = vpop.f32.mrf.mxu0
      %2255 = vmatprep.mubr.f32.mxu0 0.0
      %2256 = vmatmul.mubr.f32.gmra.mxu0 %v2056
      %v2257 = vpop.f32.mrf.mxu0
      %v2258 = vadd.f32 0.0, %v2257
      %v2259 = vpop.f32.mrf.mxu0
      %2260 = vmatprep.mubr.f32.mxu0 0.0
      %2261 = vmatmul.mubr.f32.gmra.mxu0 %v2059
      %v2262 = vpop.f32.mrf.mxu0
      %v2263 = vadd.f32 0.0, %v2262
      %v2264 = vpop.f32.mrf.mxu0
      %2265 = vmatprep.mubr.f32.mxu0 0.0
      %2266 = vmatmul.mubr.f32.gmra.mxu0 %v2062
      %v2267 = vpop.f32.mrf.mxu0
      %v2268 = vadd.f32 0.0, %v2267
      %v2269 = vpop.f32.mrf.mxu0
      %2270 = vmatprep.mubr.f32.mxu0 0.0
      %2271 = vmatmul.mubr.f32.gmra.mxu0 %v2065
      %v2272 = vpop.f32.mrf.mxu0
      %v2273 = vadd.f32 0.0, %v2272
      %v2274 = vpop.f32.mrf.mxu0
      %2275 = vmatprep.mubr.f32.mxu0 0.0
      %2276 = vmatmul.mubr.f32.gmra.mxu0 %v2068
      %v2277 = vpop.f32.mrf.mxu0
      %v2278 = vadd.f32 0.0, %v2277
      %v2279 = vpop.f32.mrf.mxu0
      %2280 = vmatprep.mubr.f32.mxu0 0.0
      %2281 = vmatmul.mubr.f32.gmra.mxu0 %v2071
      %v2282 = vpop.f32.mrf.mxu0
      %v2283 = vadd.f32 0.0, %v2282
      %v2284 = vpop.f32.mrf.mxu0
      %2285 = vmatprep.mubr.f32.mxu0 0.0
      %2286 = vmatmul.mubr.f32.gmra.mxu0 %v2074
      %v2287 = vpop.f32.mrf.mxu0
      %v2288 = vadd.f32 0.0, %v2287
      %v2289 = vpop.f32.mrf.mxu0
      %2290 = vmatprep.mubr.f32.mxu0 0.0
      %2291 = vmatmul.mubr.f32.gmra.mxu0 %v2077
      %v2292 = vpop.f32.mrf.mxu0
      %v2293 = vadd.f32 0.0, %v2292
      %v2294 = vpop.f32.mrf.mxu0
      %2295 = vmatprep.mubr.f32.mxu0 0.0
      %2296 = vmatmul.mubr.f32.gmra.mxu0 %v2080
      %v2297 = vpop.f32.mrf.mxu0
      %v2298 = vadd.f32 0.0, %v2297
      %v2299 = vpop.f32.mrf.mxu0
      %2300 = vmatprep.mubr.f32.mxu0 0.0
      %2301 = vmatmul.mubr.f32.gmra.mxu0 %v2083
      %v2302 = vpop.f32.mrf.mxu0
      %v2303 = vadd.f32 0.0, %v2302
      %v2304 = vpop.f32.mrf.mxu0
      %2305 = vmatprep.mubr.f32.mxu0 0.0
      %2306 = vmatmul.mubr.f32.gmra.mxu0 %v2086
      %v2307 = vpop.f32.mrf.mxu0
      %v2308 = vadd.f32 0.0, %v2307
      %v2309 = vpop.f32.mrf.mxu0
      %2310 = vmatprep.mubr.f32.mxu0 0.0
      %2311 = vmatmul.mubr.f32.gmra.mxu0 %v2089
      %v2312 = vpop.f32.mrf.mxu0
      %v2313 = vadd.f32 0.0, %v2312
      %v2314 = vpop.f32.mrf.mxu0
      %2315 = vdwg.mxu0
      %2316 = vst.msk [vmem:[%s290] sm:$0xff] %vm359, %v2158
      %2317 = vst.msk [vmem:[%s290 + $0x8] sm:$0xff] %vm359, %v2163
      %2318 = vst.msk [vmem:[%s290 + $0x10] sm:$0xff] %vm359, %v2168
      %2319 = vst.msk [vmem:[%s290 + $0x18] sm:$0xff] %vm359, %v2173
      %2320 = vst.msk [vmem:[%s290 + $0x20] sm:$0xff] %vm359, %v2178
      %2321 = vst.msk [vmem:[%s290 + $0x28] sm:$0xff] %vm359, %v2183
      %2322 = vst.msk [vmem:[%s290 + $0x30] sm:$0xff] %vm359, %v2188
      %2323 = vst.msk [vmem:[%s290 + $0x38] sm:$0xff] %vm359, %v2193
      %2324 = vst.msk [vmem:[%s290 + $0x40] sm:$0xff] %vm359, %v2198
      %2325 = vst.msk [vmem:[%s290 + $0x48] sm:$0xff] %vm359, %v2203
      %2326 = vst.msk [vmem:[%s290 + $0x50] sm:$0xff] %vm359, %v2208
      %2327 = vst.msk [vmem:[%s290 + $0x58] sm:$0xff] %vm359, %v2213
      %2328 = vst.msk [vmem:[%s290 + $0x60] sm:$0xff] %vm359, %v2218
      %2329 = vst.msk [vmem:[%s290 + $0x68] sm:$0xff] %vm359, %v2223
      %2330 = vst.msk [vmem:[%s290 + $0x70] sm:$0xff] %vm359, %v2228
      %2331 = vst.msk [vmem:[%s290 + $0x78] sm:$0xff] %vm359, %v2233
      %2332 = vst.msk [vmem:[%s290 + $0x80] sm:$0xff] %vm359, %v2238
      %2333 = vst.msk [vmem:[%s290 + $0x88] sm:$0xff] %vm359, %v2243
      %2334 = vst.msk [vmem:[%s290 + $0x90] sm:$0xff] %vm359, %v2248
      %2335 = vst.msk [vmem:[%s290 + $0x98] sm:$0xff] %vm359, %v2253
      %2336 = vst.msk [vmem:[%s290 + $0xa0] sm:$0xff] %vm359, %v2258
      %2337 = vst.msk [vmem:[%s290 + $0xa8] sm:$0xff] %vm359, %v2263
      %2338 = vst.msk [vmem:[%s290 + $0xb0] sm:$0xff] %vm359, %v2268
      %2339 = vst.msk [vmem:[%s290 + $0xb8] sm:$0xff] %vm359, %v2273
      %2340 = vst.msk [vmem:[%s290 + $0xc0] sm:$0xff] %vm359, %v2278
      %2341 = vst.msk [vmem:[%s290 + $0xc8] sm:$0xff] %vm359, %v2283
      %2342 = vst.msk [vmem:[%s290 + $0xd0] sm:$0xff] %vm359, %v2288
      %2343 = vst.msk [vmem:[%s290 + $0xd8] sm:$0xff] %vm359, %v2293
      %2344 = vst.msk [vmem:[%s290 + $0xe0] sm:$0xff] %vm359, %v2298
      %2345 = vst.msk [vmem:[%s290 + $0xe8] sm:$0xff] %vm359, %v2303
      %2346 = vst.msk [vmem:[%s290 + $0xf0] sm:$0xff] %vm359, %v2308
      %2347 = vst.msk [vmem:[%s290 + $0xf8] sm:$0xff] %vm359, %v2313
      %s2348 = scalar_lea.vmem [#allocation2], 384
      %v2349 = vld [vmem:[%s2348] sm:$0xff]
      %v2350 = vld [vmem:[%s2348 + $0x8] sm:$0xff]
      %v2351 = vld [vmem:[%s2348 + $0x10] sm:$0x3]
      %v2352 = vld [vmem:[%s2348 + $0x18] sm:$0xff]
      %v2353 = vld [vmem:[%s2348 + $0x20] sm:$0xff]
      %v2354 = vld [vmem:[%s2348 + $0x28] sm:$0x3]
      %2355 = vst.msk [vmem:[#allocation2] sm:$0xff] %vm359, %v2349
      %2356 = vst.msk [vmem:[#allocation2 + $0x8] sm:$0xff] %vm359, %v2350
      %2357 = vst.msk [vmem:[#allocation2 + $0x10] sm:$0x3] %vm362, %v2351
      %2358 = vst.msk [vmem:[#allocation2 + $0x18] sm:$0xff] %vm359, %v2352
      %2359 = vst.msk [vmem:[#allocation2 + $0x20] sm:$0xff] %vm359, %v2353
      %2360 = vst.msk [vmem:[#allocation2 + $0x28] sm:$0x3] %vm362, %v2354
      %s2361 = sadd.s32 %s20, %s21
      %p2362 = scmp.lt.s32.totalorder %s19, 0
      %s2363 = scalar_select %p2362, %s19, 0
      %p2364 = scmp.lt.s32.totalorder %s2361, 1
      %s2365 = scalar_select %p2364, %s2361, 1
      %s2366 = smul.addr %s2365, 32
      %s2367 = smul.addr %s2363, 64
      %s2368 = sadd.s32 %s2366, %s2367
      %s2369 = smul.addr %s2368, 8
      %s2370 = scalar_lea.vmem %s3, %s2369
      // Predicated region
      $region37: #{conv_forward.1} parent=31 // pred_check
        %p2371 = pneg %p139
      $region38: #{conv_forward.1} parent=31 // pred_check_branch
        %2373 = sbr.rel (%p2371) target = $region40
      $region39: #{conv_forward.1} parent=31 // pred_region
        %s2374 = sadd.s32 %s20, %s21
      $region40: #{conv_forward.1} parent=31 // pred_fallthru
        _
    $region32: #{conv_forward.1} parent=5 // pred_fallthru
      _
    %p2375 = scmp.le.s32.totalorder 2, %s9
    // Predicated region
    $region41: #{conv_forward.1} parent=5 // pred_check
      %p2376 = pneg %p2375
    $region42: #{conv_forward.1} parent=5 // pred_check_branch
      %2378 = sbr.rel (%p2376) target = $region44
    $region43: #{conv_forward.1} parent=5 // pred_region
      %s2379 = ssub.s32 %s9, 2
      // Predicated region
      $region45: #{conv_forward.1} parent=43 // pred_check
        %p2380 = pneg %p145
      $region46: #{conv_forward.1} parent=43 // pred_check_branch
        %2382 = sbr.rel (%p2380) target = $region48
      $region47: #{conv_forward.1} parent=43 // pred_region
        %s2383 = sadd.s32 %s23, %s24
        %p2384 = scmp.lt.s32.totalorder %s22, 0
        %s2385 = scalar_select %p2384, %s22, 0
        %p2386 = scmp.lt.s32.totalorder %s2383, 1
        %s2387 = scalar_select %p2386, %s2383, 1
        %s2388 = smul.addr %s2387, 32
        %s2389 = smul.addr %s2385, 64
        %s2390 = sadd.s32 %s2388, %s2389
        %s2391 = smul.addr %s2390, 8
        %s2392 = scalar_lea.vmem %s3, %s2391
      $region48: #{conv_forward.1} parent=43 // pred_fallthru
        _
    $region44: #{conv_forward.1} parent=5 // pred_fallthru
      _
  $region6: #{conv_forward.1} parent=0 // loop_footer
    %s13 = sadd.s32 1, %s9
  $region7: #{conv_forward.1} parent=0 // loop_footer_branch
    %8 = sbr.rel target = $region3
  $region8: #{conv_forward.1} parent=0 // loop_exit
    _

</llo_original>
